<compile_context>
chip_gen: v7x
topology: tpu7x:2x2x1
jax: 0.10.0
libtpu: 0.0.40
codegen_flags: <defaults>
</compile_context>

<pallas_src>
import functools

import numpy as np

import jax
import jax.numpy as jnp
from jax.experimental import pallas as pl
from jax.experimental.pallas import tpu as pltpu


# --------------------------------------------------------------------------- utilities

def _round_up(n, m):
    return (n + m - 1) // m * m


def _full_spec(shape):
    n = len(shape)
    return pl.BlockSpec(shape, lambda i, n=n: (0,) * n)


# ----------------------------------------------------------------------------- kernel

def _make_series_kernel(plan, disps, guard, width, eps, n_valid):
    """Fused kernel for a whole BlockSeries.

    plan:  tuple of (relu, add_residual, snapshot_block_input) per conv layer.
    disps: 9 static flat-index displacements, tap t = ky*3+kx -> (ky-1)*Wp + (kx-1).
    guard: zero-guard lane count on each side of the activation slab.
    width: M, the lane-dense output width (multiple of 128).
    """
    inv_n = 1.0 / float(n_valid)
    G, M = guard, width
    L = len(plan)

    def kernel(x_ref, mask_ref, w_ref, g_ref, b_ref, o_ref, h_ref, stk_ref):
        C = o_ref.shape[0]                       # channel rows (padded to multiple of 16)
        mask = mask_ref[...]                     # (1, M) 0/1 over valid (non-halo) pos.
        h_ref[...] = x_ref[...]                  # guarded activation slab (MXU dtype)
        res = None

        for l, (relu, add_res, snap) in enumerate(plan):
            if snap:
                res = h_ref[:, G:G + M]          # residual = block input (stays in VMEM)

            # ---- 3x3 same conv == ONE (C, 9C) @ (9C, M) MXU matmul ----------------
            # Stack the 9 shifted copies along sublanes; the zero guard + zero halo
            # provide the "same" padding, so no per-tap masks are needed.
            for t, d in enumerate(disps):
                stk_ref[t * C:(t + 1) * C, :] = h_ref[:, G + d:G + d + M]
            acc = jnp.dot(w_ref[l], stk_ref[...],
                          preferred_element_type=jnp.float32)        # (C, M) f32

            # ---- BatchNorm2d training stats (masked, one data pass, f32) ----------
            am = acc * mask                                           # masked values
            mean = jnp.sum(am, axis=1, keepdims=True) * inv_n         # (C, 1)
            ex2 = jnp.sum(am * acc, axis=1, keepdims=True) * inv_n    # E[x^2] (masked)
            var = ex2 - mean * mean
            scale = jax.lax.rsqrt(var + eps) * g_ref[l]               # (C, 1)
            bias = b_ref[l] - mean * scale
            y = acc * scale + bias

            # ---- fused epilogue: (+residual) (+ReLU) * mask (restores zeros) ------
            if add_res:
                y = y + res                      # bf16/f32 residual promotes to f32
            if relu:
                y = jnp.maximum(y, 0.0)
            y = y * mask

            if l + 1 < L:
                h_ref[:, G:G + M] = y.astype(h_ref.dtype)   # aligned interior writeback
            else:
                o_ref[...] = y                                # lane-dense f32 output

    return kernel


# ---------------------------------------------------------------------- series forward

@functools.partial(jax.jit, static_argnames=("residual", "mxu_dtype", "eps"))
def block_series_forward(x, params, *, residual, mxu_dtype=jnp.bfloat16, eps=1e-5):
    """BlockSeries forward.  x: (B, C, H, W) float32 (NCHW, as in the PyTorch module)."""
    B, C, H, W = x.shape
    Hp, Wp = H + 2, W + 2
    Np = B * Hp * Wp
    M = _round_up(Np, 128)                       # lane-dense flattened spatial width
    G = max(128, _round_up(Wp + 1, 128))         # zero-guard lanes on each slab side
    Xw = M + 2 * G
    Cp = _round_up(C, 16)                        # channel rows padded for tile alignment

    # ---- stack per-conv-layer parameters (PyTorch OIHW weights) --------------------
    if residual:
        ws, gs, bs = [], [], []
        for p in params:
            ws += [p["w1"], p["w2"]]
            gs += [p["g1"], p["g2"]]
            bs += [p["b1"], p["b2"]]
        # ResidualBlock: conv1->bn1 (no relu), conv2->bn2, relu(out + residual)
        plan = tuple(st for _ in params
                     for st in ((False, False, True), (True, True, False)))
    else:
        ws = [p["w"] for p in params]
        gs = [p["gamma"] for p in params]
        bs = [p["beta"] for p in params]
        plan = tuple((True, False, False) for _ in params)      # conv->bn->relu
    L = len(ws)

    # Weights: (L, O, I, 3, 3) -> zero-pad channels -> (L, Cp, 9*Cp), tap-major over Cin,
    # shipped already in the MXU dtype (accumulation stays f32 in the kernel).
    w_st = jnp.stack(ws).astype(jnp.float32)
    w_st = jnp.pad(w_st, ((0, 0), (0, Cp - C), (0, Cp - C), (0, 0), (0, 0)))
    w_stk = jnp.transpose(w_st, (0, 1, 3, 4, 2)).reshape(L, Cp, 9 * Cp).astype(mxu_dtype)
    gamma = jnp.pad(jnp.stack(gs).astype(jnp.float32), ((0, 0), (0, Cp - C)),
                    constant_values=1.0).reshape(L, Cp, 1)
    beta = jnp.pad(jnp.stack(bs).astype(jnp.float32),
                   ((0, 0), (0, Cp - C))).reshape(L, Cp, 1)

    # ---- pack input once into the zero-guarded lane-dense slab (Cp, G + M + G) -----
    xp = jnp.pad(x.astype(jnp.float32), ((0, 0), (0, Cp - C), (1, 1), (1, 1)))
    xp = jnp.transpose(xp, (1, 0, 2, 3)).reshape(Cp, Np)
    slab = jnp.pad(xp, ((0, 0), (G, G + M - Np))).astype(mxu_dtype)       # (Cp, Xw)

    core = np.zeros((B, Hp, Wp), np.float32)
    core[:, 1:H + 1, 1:W + 1] = 1.0
    mask_np = np.zeros((1, M), np.float32)
    mask_np[0, :Np] = core.reshape(-1)
    mask = jnp.asarray(mask_np)

    # Tap t = ky*3 + kx reads the input displaced by (ky-1)*Wp + (kx-1) in flat index.
    disps = tuple((ky - 1) * Wp + (kx - 1) for ky in range(3) for kx in range(3))

    kernel = _make_series_kernel(plan, disps, G, M, eps, n_valid=B * H * W)
    inputs = (slab, mask, w_stk, gamma, beta)

    mxu_bytes = np.dtype(mxu_dtype).itemsize
    in_bytes = sum(int(np.prod(a.shape)) * np.dtype(a.dtype).itemsize for a in inputs)
    out_bytes = Cp * M * 4
    scratch_bytes = Cp * Xw * mxu_bytes + 9 * Cp * M * mxu_bytes
    vmem_limit = int(min(max(2 * (in_bytes + out_bytes) + scratch_bytes + (8 << 20),
                             32 << 20), 64 << 20))

    cost = pl.CostEstimate(
        flops=2 * L * Cp * (9 * Cp) * M,
        transcendentals=L * Cp,
        bytes_accessed=in_bytes + out_bytes,
    )

    out = pl.pallas_call(
        kernel,
        grid=(1,),
        in_specs=[_full_spec(a.shape) for a in inputs],
        out_specs=_full_spec((Cp, M)),
        out_shape=jax.ShapeDtypeStruct((Cp, M), jnp.float32),
        scratch_shapes=[pltpu.VMEM((Cp, Xw), mxu_dtype),        # guarded activation slab
                        pltpu.VMEM((9 * Cp, M), mxu_dtype)],    # stacked-tap MXU operand
        compiler_params=pltpu.CompilerParams(
            dimension_semantics=("arbitrary",),
            vmem_limit_bytes=vmem_limit),
        cost_estimate=cost,
    )(*inputs)

    # ---- unpack lane-dense slab back to NCHW (layout plumbing, once per series) ----
    o = out[:C, :Np].reshape(C, B, Hp, Wp)[:, :, 1:H + 1, 1:W + 1]
    return jnp.transpose(o, (1, 0, 2, 3))


# ------------------------------------------------------------------- parameter helpers

def init_block_params(key, planes):
    k1, k2, k3 = jax.random.split(key, 3)
    return {
        "w": 0.2 * jax.random.normal(k1, (planes, planes, 3, 3), jnp.float32),  # OIHW
        "gamma": 1.0 + 0.1 * jax.random.normal(k2, (planes,), jnp.float32),
        "beta": 0.1 * jax.random.normal(k3, (planes,), jnp.float32),
    }


def init_residual_block_params(key, planes):
    ka, kb = jax.random.split(key)
    p1, p2 = init_block_params(ka, planes), init_block_params(kb, planes)
    return {"w1": p1["w"], "g1": p1["gamma"], "b1": p1["beta"],
            "w2": p2["w"], "g2": p2["gamma"], "b2": p2["beta"]}


def init_block_series(key, planes, n_blocks, residual):
    keys = jax.random.split(key, n_blocks)
    if residual:
        return [init_residual_block_params(k, planes) for k in keys]
    return [init_block_params(k, planes) for k in keys]


# ----------------------------------------------------------------------- pure-JAX ref

def _ref_conv_bn(x, w, gamma, beta, *, relu, residual=None, eps=1e-5):
    out = jax.lax.conv_general_dilated(
        x, w, window_strides=(1, 1), padding=((1, 1), (1, 1)),
        dimension_numbers=("NCHW", "OIHW", "NCHW"),
    )
    mean = out.mean(axis=(0, 2, 3), keepdims=True)
    var = ((out - mean) ** 2).mean(axis=(0, 2, 3), keepdims=True)
    y = (out - mean) / jnp.sqrt(var + eps) * gamma.reshape(1, -1, 1, 1) \
        + beta.reshape(1, -1, 1, 1)
    if residual is not None:
        y = y + residual
    if relu:
        y = jnp.maximum(y, 0.0)
    return y


def _ref_block_series(x, params, residual):
    for p in params:
        if residual:
            out = _ref_conv_bn(x, p["w1"], p["g1"], p["b1"], relu=False)
            x = _ref_conv_bn(out, p["w2"], p["g2"], p["b2"], relu=True, residual=x)
        else:
            x = _ref_conv_bn(x, p["w"], p["gamma"], p["beta"], relu=True)
    return x


# -------------------------------------------------------------------------------- main

if __name__ == "__main__":
    key = jax.random.PRNGKey(0)
    kx, kp_plain, kp_res = jax.random.split(key, 3)

    B, C, H, W = 2, 4, 16, 16          # NCHW, matching the PyTorch module
    n_blocks = 2
    x = jax.random.normal(kx, (B, C, H, W), jnp.float32)

    # Plain Block chain (conv->bn->relu), strict f32 check.
    params_plain = init_block_series(kp_plain, C, n_blocks, residual=False)
    y_plain = jax.block_until_ready(
        block_series_forward(x, params_plain, residual=False, mxu_dtype=jnp.float32))
    y_plain_ref = _ref_block_series(x, params_plain, residual=False)
    assert jnp.allclose(y_plain, y_plain_ref, atol=1e-4, rtol=1e-4), "plain mismatch"

    # ResidualBlock chain, strict f32 check.
    params_res = init_block_series(kp_res, C, n_blocks, residual=True)
    y_res = jax.block_until_ready(
        block_series_forward(x, params_res, residual=True, mxu_dtype=jnp.float32))
    y_res_ref = _ref_block_series(x, params_res, residual=True)
    assert jnp.allclose(y_res, y_res_ref, atol=1e-4, rtol=1e-4), "residual mismatch"

    # bf16 fast path (bf16 MXU operands + bf16 slab residency, f32 accumulation and
    # f32 BN statistics); loose tolerance by construction.
    y_bf16 = jax.block_until_ready(
        block_series_forward(x, params_res, residual=True, mxu_dtype=jnp.bfloat16))
    assert jnp.allclose(y_bf16, y_res_ref, atol=2.5e-1, rtol=1e-1), "bf16 mismatch"

    print("KERNEL_OK")
</pallas_src>

<mosaic_0001>
module attributes {stable_mosaic.version = 11 : i64} {
  func.func @kernel(%arg0: i32, %arg1: memref<16x1024xf32, #tpu.memory_space<vmem>>, %arg2: memref<1x768xf32, #tpu.memory_space<vmem>>, %arg3: memref<2x16x144xf32, #tpu.memory_space<vmem>>, %arg4: memref<2x16x1xf32, #tpu.memory_space<vmem>>, %arg5: memref<2x16x1xf32, #tpu.memory_space<vmem>>, %arg6: memref<16x768xf32, #tpu.memory_space<vmem>>, %arg7: memref<16x1024xf32, #tpu.memory_space<vmem>>, %arg8: memref<144x768xf32, #tpu.memory_space<vmem>>) attributes {dimension_semantics = [#tpu.dimension_semantics<arbitrary>], iteration_bounds = array<i64: 1>, scalar_prefetch = 0 : i64, scratch_operands = 2 : i64, tpu.core_type = #tpu.core_type<tc>, window_params = [{pipeline_mode = #tpu.pipeline_mode<synchronous>, transform_indices = @transform_0, window_bounds = array<i64: 16, 1024>}, {pipeline_mode = #tpu.pipeline_mode<synchronous>, transform_indices = @transform_1, window_bounds = array<i64: 1, 768>}, {pipeline_mode = #tpu.pipeline_mode<synchronous>, transform_indices = @transform_2, window_bounds = array<i64: 2, 16, 144>}, {pipeline_mode = #tpu.pipeline_mode<synchronous>, transform_indices = @transform_3, window_bounds = array<i64: 2, 16, 1>}, {pipeline_mode = #tpu.pipeline_mode<synchronous>, transform_indices = @transform_4, window_bounds = array<i64: 2, 16, 1>}, {pipeline_mode = #tpu.pipeline_mode<synchronous>, transform_indices = @transform_5, window_bounds = array<i64: 16, 768>}]} {
    %c0 = arith.constant 0 : index
    %c0_0 = arith.constant 0 : index
    %0 = vector.load %arg2[%c0, %c0_0] : memref<1x768xf32, #tpu.memory_space<vmem>>, vector<1x768xf32>
    %c0_1 = arith.constant 0 : index
    %c0_2 = arith.constant 0 : index
    %1 = vector.load %arg1[%c0_1, %c0_2] : memref<16x1024xf32, #tpu.memory_space<vmem>>, vector<16x1024xf32>
    %c0_3 = arith.constant 0 : index
    %c0_4 = arith.constant 0 : index
    %2 = vector.load %arg7[%c0_3, %c0_4] : memref<16x1024xf32, #tpu.memory_space<vmem>>, vector<16x1024xf32>
    tpu.vector_store %arg7[%c0_3, %c0_4], %1 {strides = array<i32>} : memref<16x1024xf32, #tpu.memory_space<vmem>>, vector<16x1024xf32>,
    %c0_5 = arith.constant 0 : index
    %c109 = arith.constant 109 : index
    %3 = vector.load %arg7[%c0_5, %c109] : memref<16x1024xf32, #tpu.memory_space<vmem>>, vector<16x768xf32>
    %c0_6 = arith.constant 0 : index
    %c0_7 = arith.constant 0 : index
    %4 = vector.load %arg8[%c0_6, %c0_7] : memref<144x768xf32, #tpu.memory_space<vmem>>, vector<16x768xf32>
    tpu.vector_store %arg8[%c0_6, %c0_7], %3 {strides = array<i32>} : memref<144x768xf32, #tpu.memory_space<vmem>>, vector<16x768xf32>,
    %c0_8 = arith.constant 0 : index
    %c110 = arith.constant 110 : index
    %5 = vector.load %arg7[%c0_8, %c110] : memref<16x1024xf32, #tpu.memory_space<vmem>>, vector<16x768xf32>
    %c16 = arith.constant 16 : index
    %c0_9 = arith.constant 0 : index
    %6 = vector.load %arg8[%c16, %c0_9] : memref<144x768xf32, #tpu.memory_space<vmem>>, vector<16x768xf32>
    tpu.vector_store %arg8[%c16, %c0_9], %5 {strides = array<i32>} : memref<144x768xf32, #tpu.memory_space<vmem>>, vector<16x768xf32>,
    %c0_10 = arith.constant 0 : index
    %c111 = arith.constant 111 : index
    %7 = vector.load %arg7[%c0_10, %c111] : memref<16x1024xf32, #tpu.memory_space<vmem>>, vector<16x768xf32>
    %c32 = arith.constant 32 : index
    %c0_11 = arith.constant 0 : index
    %8 = vector.load %arg8[%c32, %c0_11] : memref<144x768xf32, #tpu.memory_space<vmem>>, vector<16x768xf32>
    tpu.vector_store %arg8[%c32, %c0_11], %7 {strides = array<i32>} : memref<144x768xf32, #tpu.memory_space<vmem>>, vector<16x768xf32>,
    %c0_12 = arith.constant 0 : index
    %c127 = arith.constant 127 : index
    %9 = vector.load %arg7[%c0_12, %c127] : memref<16x1024xf32, #tpu.memory_space<vmem>>, vector<16x768xf32>
    %c48 = arith.constant 48 : index
    %c0_13 = arith.constant 0 : index
    %10 = vector.load %arg8[%c48, %c0_13] : memref<144x768xf32, #tpu.memory_space<vmem>>, vector<16x768xf32>
    tpu.vector_store %arg8[%c48, %c0_13], %9 {strides = array<i32>} : memref<144x768xf32, #tpu.memory_space<vmem>>, vector<16x768xf32>,
    %c0_14 = arith.constant 0 : index
    %c128 = arith.constant 128 : index
    %11 = vector.load %arg7[%c0_14, %c128] : memref<16x1024xf32, #tpu.memory_space<vmem>>, vector<16x768xf32>
    %c64 = arith.constant 64 : index
    %c0_15 = arith.constant 0 : index
    %12 = vector.load %arg8[%c64, %c0_15] : memref<144x768xf32, #tpu.memory_space<vmem>>, vector<16x768xf32>
    tpu.vector_store %arg8[%c64, %c0_15], %11 {strides = array<i32>} : memref<144x768xf32, #tpu.memory_space<vmem>>, vector<16x768xf32>,
    %c0_16 = arith.constant 0 : index
    %c129 = arith.constant 129 : index
    %13 = vector.load %arg7[%c0_16, %c129] : memref<16x1024xf32, #tpu.memory_space<vmem>>, vector<16x768xf32>
    %c80 = arith.constant 80 : index
    %c0_17 = arith.constant 0 : index
    %14 = vector.load %arg8[%c80, %c0_17] : memref<144x768xf32, #tpu.memory_space<vmem>>, vector<16x768xf32>
    tpu.vector_store %arg8[%c80, %c0_17], %13 {strides = array<i32>} : memref<144x768xf32, #tpu.memory_space<vmem>>, vector<16x768xf32>,
    %c0_18 = arith.constant 0 : index
    %c145 = arith.constant 145 : index
    %15 = vector.load %arg7[%c0_18, %c145] : memref<16x1024xf32, #tpu.memory_space<vmem>>, vector<16x768xf32>
    %c96 = arith.constant 96 : index
    %c0_19 = arith.constant 0 : index
    %16 = vector.load %arg8[%c96, %c0_19] : memref<144x768xf32, #tpu.memory_space<vmem>>, vector<16x768xf32>
    tpu.vector_store %arg8[%c96, %c0_19], %15 {strides = array<i32>} : memref<144x768xf32, #tpu.memory_space<vmem>>, vector<16x768xf32>,
    %c0_20 = arith.constant 0 : index
    %c146 = arith.constant 146 : index
    %17 = vector.load %arg7[%c0_20, %c146] : memref<16x1024xf32, #tpu.memory_space<vmem>>, vector<16x768xf32>
    %c112 = arith.constant 112 : index
    %c0_21 = arith.constant 0 : index
    %18 = vector.load %arg8[%c112, %c0_21] : memref<144x768xf32, #tpu.memory_space<vmem>>, vector<16x768xf32>
    tpu.vector_store %arg8[%c112, %c0_21], %17 {strides = array<i32>} : memref<144x768xf32, #tpu.memory_space<vmem>>, vector<16x768xf32>,
    %c0_22 = arith.constant 0 : index
    %c147 = arith.constant 147 : index
    %19 = vector.load %arg7[%c0_22, %c147] : memref<16x1024xf32, #tpu.memory_space<vmem>>, vector<16x768xf32>
    %c128_23 = arith.constant 128 : index
    %c0_24 = arith.constant 0 : index
    %20 = vector.load %arg8[%c128_23, %c0_24] : memref<144x768xf32, #tpu.memory_space<vmem>>, vector<16x768xf32>
    tpu.vector_store %arg8[%c128_23, %c0_24], %19 {strides = array<i32>} : memref<144x768xf32, #tpu.memory_space<vmem>>, vector<16x768xf32>,
    %c0_25 = arith.constant 0 : index
    %c0_26 = arith.constant 0 : index
    %c0_27 = arith.constant 0 : index
    %21 = vector.load %arg3[%c0_25, %c0_26, %c0_27] : memref<2x16x144xf32, #tpu.memory_space<vmem>>, vector<1x16x144xf32>
    %22 = vector.shape_cast %21 : vector<1x16x144xf32> to vector<16x144xf32>
    %c0_28 = arith.constant 0 : index
    %c0_29 = arith.constant 0 : index
    %23 = vector.load %arg8[%c0_28, %c0_29] : memref<144x768xf32, #tpu.memory_space<vmem>>, vector<144x768xf32>
    %cst = arith.constant dense<0.000000e+00> : vector<16x768xf32>
    %24 = tpu.matmul %22, %23, %cst {dimension_numbers = #tpu.dot_dimension_numbers<[1], [0], [0], [1], [0, 0, 1, 1], [], []>} : vector<16x144xf32>, vector<144x768xf32>, vector<16x768xf32> -> vector<16x768xf32>
    %25 = vector.broadcast %0 : vector<1x768xf32> to vector<16x768xf32>
    %26 = arith.mulf %24, %25 : vector<16x768xf32>
    %cst_30 = arith.constant dense<0.000000e+00> : vector<16xf32>
    %27 = vector.multi_reduction <add>, %26, %cst_30 [1] : vector<16x768xf32> to vector<16xf32>
    %28 = vector.shape_cast %27 : vector<16xf32> to vector<16x1xf32>
    %cst_31 = arith.constant 0.001953125 : f32
    %29 = vector.broadcast %cst_31 : f32 to vector<16x1xf32>
    %30 = arith.mulf %28, %29 : vector<16x1xf32>
    %31 = arith.mulf %26, %24 : vector<16x768xf32>
    %cst_32 = arith.constant dense<0.000000e+00> : vector<16xf32>
    %32 = vector.multi_reduction <add>, %31, %cst_32 [1] : vector<16x768xf32> to vector<16xf32>
    %33 = vector.shape_cast %32 : vector<16xf32> to vector<16x1xf32>
    %cst_33 = arith.constant 0.001953125 : f32
    %34 = vector.broadcast %cst_33 : f32 to vector<16x1xf32>
    %35 = arith.mulf %33, %34 : vector<16x1xf32>
    %36 = arith.mulf %30, %30 : vector<16x1xf32>
    %37 = arith.subf %35, %36 : vector<16x1xf32>
    %cst_34 = arith.constant 9.99999974E-6 : f32
    %38 = vector.broadcast %cst_34 : f32 to vector<16x1xf32>
    %39 = arith.addf %37, %38 : vector<16x1xf32>
    %40 = math.rsqrt %39 : vector<16x1xf32>
    %c0_35 = arith.constant 0 : index
    %c0_36 = arith.constant 0 : index
    %c0_37 = arith.constant 0 : index
    %41 = vector.load %arg4[%c0_35, %c0_36, %c0_37] : memref<2x16x1xf32, #tpu.memory_space<vmem>>, vector<1x16x1xf32>
    %42 = vector.shape_cast %41 : vector<1x16x1xf32> to vector<16x1xf32>
    %43 = arith.mulf %40, %42 : vector<16x1xf32>
    %c0_38 = arith.constant 0 : index
    %c0_39 = arith.constant 0 : index
    %c0_40 = arith.constant 0 : index
    %44 = vector.load %arg5[%c0_38, %c0_39, %c0_40] : memref<2x16x1xf32, #tpu.memory_space<vmem>>, vector<1x16x1xf32>
    %45 = vector.shape_cast %44 : vector<1x16x1xf32> to vector<16x1xf32>
    %46 = arith.mulf %30, %43 : vector<16x1xf32>
    %47 = arith.subf %45, %46 : vector<16x1xf32>
    %48 = vector.broadcast %43 : vector<16x1xf32> to vector<16x768xf32>
    %49 = arith.mulf %24, %48 : vector<16x768xf32>
    %50 = vector.broadcast %47 : vector<16x1xf32> to vector<16x768xf32>
    %51 = arith.addf %49, %50 : vector<16x768xf32>
    %cst_41 = arith.constant 0.000000e+00 : f32
    %52 = vector.broadcast %cst_41 : f32 to vector<16x768xf32>
    %53 = arith.maximumf %51, %52 : vector<16x768xf32>
    %54 = vector.broadcast %0 : vector<1x768xf32> to vector<16x768xf32>
    %55 = arith.mulf %53, %54 : vector<16x768xf32>
    %c0_42 = arith.constant 0 : index
    %c128_43 = arith.constant 128 : index
    %56 = vector.load %arg7[%c0_42, %c128_43] : memref<16x1024xf32, #tpu.memory_space<vmem>>, vector<16x768xf32>
    tpu.vector_store %arg7[%c0_42, %c128_43], %55 {strides = array<i32>} : memref<16x1024xf32, #tpu.memory_space<vmem>>, vector<16x768xf32>,
    %c0_44 = arith.constant 0 : index
    %c109_45 = arith.constant 109 : index
    %57 = vector.load %arg7[%c0_44, %c109_45] : memref<16x1024xf32, #tpu.memory_space<vmem>>, vector<16x768xf32>
    %c0_46 = arith.constant 0 : index
    %c0_47 = arith.constant 0 : index
    %58 = vector.load %arg8[%c0_46, %c0_47] : memref<144x768xf32, #tpu.memory_space<vmem>>, vector<16x768xf32>
    tpu.vector_store %arg8[%c0_46, %c0_47], %57 {strides = array<i32>} : memref<144x768xf32, #tpu.memory_space<vmem>>, vector<16x768xf32>,
    %c0_48 = arith.constant 0 : index
    %c110_49 = arith.constant 110 : index
    %59 = vector.load %arg7[%c0_48, %c110_49] : memref<16x1024xf32, #tpu.memory_space<vmem>>, vector<16x768xf32>
    %c16_50 = arith.constant 16 : index
    %c0_51 = arith.constant 0 : index
    %60 = vector.load %arg8[%c16_50, %c0_51] : memref<144x768xf32, #tpu.memory_space<vmem>>, vector<16x768xf32>
    tpu.vector_store %arg8[%c16_50, %c0_51], %59 {strides = array<i32>} : memref<144x768xf32, #tpu.memory_space<vmem>>, vector<16x768xf32>,
    %c0_52 = arith.constant 0 : index
    %c111_53 = arith.constant 111 : index
    %61 = vector.load %arg7[%c0_52, %c111_53] : memref<16x1024xf32, #tpu.memory_space<vmem>>, vector<16x768xf32>
    %c32_54 = arith.constant 32 : index
    %c0_55 = arith.constant 0 : index
    %62 = vector.load %arg8[%c32_54, %c0_55] : memref<144x768xf32, #tpu.memory_space<vmem>>, vector<16x768xf32>
    tpu.vector_store %arg8[%c32_54, %c0_55], %61 {strides = array<i32>} : memref<144x768xf32, #tpu.memory_space<vmem>>, vector<16x768xf32>,
    %c0_56 = arith.constant 0 : index
    %c127_57 = arith.constant 127 : index
    %63 = vector.load %arg7[%c0_56, %c127_57] : memref<16x1024xf32, #tpu.memory_space<vmem>>, vector<16x768xf32>
    %c48_58 = arith.constant 48 : index
    %c0_59 = arith.constant 0 : index
    %64 = vector.load %arg8[%c48_58, %c0_59] : memref<144x768xf32, #tpu.memory_space<vmem>>, vector<16x768xf32>
    tpu.vector_store %arg8[%c48_58, %c0_59], %63 {strides = array<i32>} : memref<144x768xf32, #tpu.memory_space<vmem>>, vector<16x768xf32>,
    %c0_60 = arith.constant 0 : index
    %c128_61 = arith.constant 128 : index
    %65 = vector.load %arg7[%c0_60, %c128_61] : memref<16x1024xf32, #tpu.memory_space<vmem>>, vector<16x768xf32>
    %c64_62 = arith.constant 64 : index
    %c0_63 = arith.constant 0 : index
    %66 = vector.load %arg8[%c64_62, %c0_63] : memref<144x768xf32, #tpu.memory_space<vmem>>, vector<16x768xf32>
    tpu.vector_store %arg8[%c64_62, %c0_63], %65 {strides = array<i32>} : memref<144x768xf32, #tpu.memory_space<vmem>>, vector<16x768xf32>,
    %c0_64 = arith.constant 0 : index
    %c129_65 = arith.constant 129 : index
    %67 = vector.load %arg7[%c0_64, %c129_65] : memref<16x1024xf32, #tpu.memory_space<vmem>>, vector<16x768xf32>
    %c80_66 = arith.constant 80 : index
    %c0_67 = arith.constant 0 : index
    %68 = vector.load %arg8[%c80_66, %c0_67] : memref<144x768xf32, #tpu.memory_space<vmem>>, vector<16x768xf32>
    tpu.vector_store %arg8[%c80_66, %c0_67], %67 {strides = array<i32>} : memref<144x768xf32, #tpu.memory_space<vmem>>, vector<16x768xf32>,
    %c0_68 = arith.constant 0 : index
    %c145_69 = arith.constant 145 : index
    %69 = vector.load %arg7[%c0_68, %c145_69] : memref<16x1024xf32, #tpu.memory_space<vmem>>, vector<16x768xf32>
    %c96_70 = arith.constant 96 : index
    %c0_71 = arith.constant 0 : index
    %70 = vector.load %arg8[%c96_70, %c0_71] : memref<144x768xf32, #tpu.memory_space<vmem>>, vector<16x768xf32>
    tpu.vector_store %arg8[%c96_70, %c0_71], %69 {strides = array<i32>} : memref<144x768xf32, #tpu.memory_space<vmem>>, vector<16x768xf32>,
    %c0_72 = arith.constant 0 : index
    %c146_73 = arith.constant 146 : index
    %71 = vector.load %arg7[%c0_72, %c146_73] : memref<16x1024xf32, #tpu.memory_space<vmem>>, vector<16x768xf32>
    %c112_74 = arith.constant 112 : index
    %c0_75 = arith.constant 0 : index
    %72 = vector.load %arg8[%c112_74, %c0_75] : memref<144x768xf32, #tpu.memory_space<vmem>>, vector<16x768xf32>
    tpu.vector_store %arg8[%c112_74, %c0_75], %71 {strides = array<i32>} : memref<144x768xf32, #tpu.memory_space<vmem>>, vector<16x768xf32>,
    %c0_76 = arith.constant 0 : index
    %c147_77 = arith.constant 147 : index
    %73 = vector.load %arg7[%c0_76, %c147_77] : memref<16x1024xf32, #tpu.memory_space<vmem>>, vector<16x768xf32>
    %c128_78 = arith.constant 128 : index
    %c0_79 = arith.constant 0 : index
    %74 = vector.load %arg8[%c128_78, %c0_79] : memref<144x768xf32, #tpu.memory_space<vmem>>, vector<16x768xf32>
    tpu.vector_store %arg8[%c128_78, %c0_79], %73 {strides = array<i32>} : memref<144x768xf32, #tpu.memory_space<vmem>>, vector<16x768xf32>,
    %c1 = arith.constant 1 : index
    %c0_80 = arith.constant 0 : index
    %c0_81 = arith.constant 0 : index
    %75 = vector.load %arg3[%c1, %c0_80, %c0_81] : memref<2x16x144xf32, #tpu.memory_space<vmem>>, vector<1x16x144xf32>
    %76 = vector.shape_cast %75 : vector<1x16x144xf32> to vector<16x144xf32>
    %c0_82 = arith.constant 0 : index
    %c0_83 = arith.constant 0 : index
    %77 = vector.load %arg8[%c0_82, %c0_83] : memref<144x768xf32, #tpu.memory_space<vmem>>, vector<144x768xf32>
    %cst_84 = arith.constant dense<0.000000e+00> : vector<16x768xf32>
    %78 = tpu.matmul %76, %77, %cst_84 {dimension_numbers = #tpu.dot_dimension_numbers<[1], [0], [0], [1], [0, 0, 1, 1], [], []>} : vector<16x144xf32>, vector<144x768xf32>, vector<16x768xf32> -> vector<16x768xf32>
    %79 = vector.broadcast %0 : vector<1x768xf32> to vector<16x768xf32>
    %80 = arith.mulf %78, %79 : vector<16x768xf32>
    %cst_85 = arith.constant dense<0.000000e+00> : vector<16xf32>
    %81 = vector.multi_reduction <add>, %80, %cst_85 [1] : vector<16x768xf32> to vector<16xf32>
    %82 = vector.shape_cast %81 : vector<16xf32> to vector<16x1xf32>
    %cst_86 = arith.constant 0.001953125 : f32
    %83 = vector.broadcast %cst_86 : f32 to vector<16x1xf32>
    %84 = arith.mulf %82, %83 : vector<16x1xf32>
    %85 = arith.mulf %80, %78 : vector<16x768xf32>
    %cst_87 = arith.constant dense<0.000000e+00> : vector<16xf32>
    %86 = vector.multi_reduction <add>, %85, %cst_87 [1] : vector<16x768xf32> to vector<16xf32>
    %87 = vector.shape_cast %86 : vector<16xf32> to vector<16x1xf32>
    %cst_88 = arith.constant 0.001953125 : f32
    %88 = vector.broadcast %cst_88 : f32 to vector<16x1xf32>
    %89 = arith.mulf %87, %88 : vector<16x1xf32>
    %90 = arith.mulf %84, %84 : vector<16x1xf32>
    %91 = arith.subf %89, %90 : vector<16x1xf32>
    %cst_89 = arith.constant 9.99999974E-6 : f32
    %92 = vector.broadcast %cst_89 : f32 to vector<16x1xf32>
    %93 = arith.addf %91, %92 : vector<16x1xf32>
    %94 = math.rsqrt %93 : vector<16x1xf32>
    %c1_90 = arith.constant 1 : index
    %c0_91 = arith.constant 0 : index
    %c0_92 = arith.constant 0 : index
    %95 = vector.load %arg4[%c1_90, %c0_91, %c0_92] : memref<2x16x1xf32, #tpu.memory_space<vmem>>, vector<1x16x1xf32>
    %96 = vector.shape_cast %95 : vector<1x16x1xf32> to vector<16x1xf32>
    %97 = arith.mulf %94, %96 : vector<16x1xf32>
    %c1_93 = arith.constant 1 : index
    %c0_94 = arith.constant 0 : index
    %c0_95 = arith.constant 0 : index
    %98 = vector.load %arg5[%c1_93, %c0_94, %c0_95] : memref<2x16x1xf32, #tpu.memory_space<vmem>>, vector<1x16x1xf32>
    %99 = vector.shape_cast %98 : vector<1x16x1xf32> to vector<16x1xf32>
    %100 = arith.mulf %84, %97 : vector<16x1xf32>
    %101 = arith.subf %99, %100 : vector<16x1xf32>
    %102 = vector.broadcast %97 : vector<16x1xf32> to vector<16x768xf32>
    %103 = arith.mulf %78, %102 : vector<16x768xf32>
    %104 = vector.broadcast %101 : vector<16x1xf32> to vector<16x768xf32>
    %105 = arith.addf %103, %104 : vector<16x768xf32>
    %cst_96 = arith.constant 0.000000e+00 : f32
    %106 = vector.broadcast %cst_96 : f32 to vector<16x768xf32>
    %107 = arith.maximumf %105, %106 : vector<16x768xf32>
    %108 = vector.broadcast %0 : vector<1x768xf32> to vector<16x768xf32>
    %109 = arith.mulf %107, %108 : vector<16x768xf32>
    %c0_97 = arith.constant 0 : index
    %c0_98 = arith.constant 0 : index
    %110 = vector.load %arg6[%c0_97, %c0_98] : memref<16x768xf32, #tpu.memory_space<vmem>>, vector<16x768xf32>
    tpu.vector_store %arg6[%c0_97, %c0_98], %109 {strides = array<i32>} : memref<16x768xf32, #tpu.memory_space<vmem>>, vector<16x768xf32>,
    return
  }
  func.func @transform_0(%arg0: i32) -> (i32, i32) {
    %c0_i32 = arith.constant 0 : i32
    %c0_i32_0 = arith.constant 0 : i32
    %c0_i32_1 = arith.constant 0 : i32
    return %c0_i32, %c0_i32_0 : i32, i32
  }
  func.func @transform_1(%arg0: i32) -> (i32, i32) {
    %c0_i32 = arith.constant 0 : i32
    %c0_i32_0 = arith.constant 0 : i32
    %c0_i32_1 = arith.constant 0 : i32
    return %c0_i32, %c0_i32_0 : i32, i32
  }
  func.func @transform_2(%arg0: i32) -> (i32, i32, i32) {
    %c0_i32 = arith.constant 0 : i32
    %c0_i32_0 = arith.constant 0 : i32
    %c0_i32_1 = arith.constant 0 : i32
    %c0_i32_2 = arith.constant 0 : i32
    return %c0_i32, %c0_i32_0, %c0_i32_1 : i32, i32, i32
  }
  func.func @transform_3(%arg0: i32) -> (i32, i32, i32) {
    %c0_i32 = arith.constant 0 : i32
    %c0_i32_0 = arith.constant 0 : i32
    %c0_i32_1 = arith.constant 0 : i32
    %c0_i32_2 = arith.constant 0 : i32
    return %c0_i32, %c0_i32_0, %c0_i32_1 : i32, i32, i32
  }
  func.func @transform_4(%arg0: i32) -> (i32, i32, i32) {
    %c0_i32 = arith.constant 0 : i32
    %c0_i32_0 = arith.constant 0 : i32
    %c0_i32_1 = arith.constant 0 : i32
    %c0_i32_2 = arith.constant 0 : i32
    return %c0_i32, %c0_i32_0, %c0_i32_1 : i32, i32, i32
  }
  func.func @transform_5(%arg0: i32) -> (i32, i32) {
    %c0_i32 = arith.constant 0 : i32
    %c0_i32_0 = arith.constant 0 : i32
    %c0_i32_1 = arith.constant 0 : i32
    return %c0_i32, %c0_i32_0 : i32, i32
  }
}

</mosaic_0001>

<llo_original>
// kernel: block_series_forward.1
$region0: #{block_series_forward.1}
  #allocation0 [shape = 'u32[]', space=smem, size = 0x4, offset = 0x4, fixed_abs, tag = 'smem constant byte address 0x4 - core index']
  #allocation1 [shape = 'u32[144,128]{1,0:T(1,128)}', space=vmem, size = 0x12000, scoped, tag = 'internal scratch']
  #allocation2 [shape = 'f32[16,1024]{1,0:T(8,128)}', space=vmem, size = 0x10000, scoped, tag = 'scratch operand']
  #allocation3 [shape = 'f32[144,768]{1,0:T(8,128)}', space=vmem, size = 0x6c000, scoped, tag = 'scratch operand']
  %s0 = inlined_call_operand.vmem [shape: f32[16,1024], index: 0, kind: input, shape index: {}]
  %s1 = inlined_call_operand.vmem [shape: f32[1,768], index: 1, kind: input, shape index: {}]
  %s2 = inlined_call_operand.vmem [shape: f32[2,16,144], index: 2, kind: input, shape index: {}]
  %s3 = inlined_call_operand.vmem [shape: f32[2,16,1], index: 3, kind: input, shape index: {}]
  %s4 = inlined_call_operand.vmem [shape: f32[2,16,1], index: 4, kind: input, shape index: {}]
  %s5 = inlined_call_operand.vmem [shape: f32[16,768], index: 5, kind: output, shape index: {}]
  %s6 = sld [smem:[#allocation0]]
  $region30: #{block_series_forward.1} parent=0
    _
  %s8 = ssub.s32 1, %s6
  %s9 = scalar_select 0, %s8, %s6
  // Predicated region
  $region2: #{block_series_forward.1} parent=0 // pred_check
    _
  $region3: #{block_series_forward.1} parent=0 // pred_check_branch
    %11 = sbr.rel (0) target = $region5
  $region4: #{block_series_forward.1} parent=0 // pred_region
    _
  $region5: #{block_series_forward.1} parent=0 // pred_fallthru
    _
  // Predicated region
  $region6: #{block_series_forward.1} parent=0 // pred_check
    _
  $region7: #{block_series_forward.1} parent=0 // pred_check_branch
    %13 = sbr.rel (0) target = $region9
  $region8: #{block_series_forward.1} parent=0 // pred_region
    _
  $region9: #{block_series_forward.1} parent=0 // pred_fallthru
    _
  // Predicated region
  $region10: #{block_series_forward.1} parent=0 // pred_check
    _
  $region11: #{block_series_forward.1} parent=0 // pred_check_branch
    %15 = sbr.rel (0) target = $region13
  $region12: #{block_series_forward.1} parent=0 // pred_region
    _
  $region13: #{block_series_forward.1} parent=0 // pred_fallthru
    _
  // Predicated region
  $region14: #{block_series_forward.1} parent=0 // pred_check
    _
  $region15: #{block_series_forward.1} parent=0 // pred_check_branch
    %17 = sbr.rel (0) target = $region17
  $region16: #{block_series_forward.1} parent=0 // pred_region
    _
  $region17: #{block_series_forward.1} parent=0 // pred_fallthru
    _
  // Predicated region
  $region18: #{block_series_forward.1} parent=0 // pred_check
    _
  $region19: #{block_series_forward.1} parent=0 // pred_check_branch
    %19 = sbr.rel (0) target = $region21
  $region20: #{block_series_forward.1} parent=0 // pred_region
    _
  $region21: #{block_series_forward.1} parent=0 // pred_fallthru
    _
  %v20 = vld [vmem:[%s1] sm:$0x3f]
  %v21 = vld [vmem:[%s0] sm:$0xff]
  %v22 = vld [vmem:[%s0 + $0x8] sm:$0xff]
  %v23 = vld [vmem:[%s0 + $0x10] sm:$0xff]
  %v24 = vld [vmem:[%s0 + $0x18] sm:$0xff]
  %v25 = vld [vmem:[%s0 + $0x20] sm:$0xff]
  %v26 = vld [vmem:[%s0 + $0x28] sm:$0xff]
  %v27 = vld [vmem:[%s0 + $0x30] sm:$0xff]
  %v28 = vld [vmem:[%s0 + $0x38] sm:$0xff]
  %v29 = vld [vmem:[%s0 + $0x40] sm:$0xff]
  %v30 = vld [vmem:[%s0 + $0x48] sm:$0xff]
  %v31 = vld [vmem:[%s0 + $0x50] sm:$0xff]
  %v32 = vld [vmem:[%s0 + $0x58] sm:$0xff]
  %v33 = vld [vmem:[%s0 + $0x60] sm:$0xff]
  %v34 = vld [vmem:[%s0 + $0x68] sm:$0xff]
  %v35 = vld [vmem:[%s0 + $0x70] sm:$0xff]
  %v36 = vld [vmem:[%s0 + $0x78] sm:$0xff]
  %37 = vst [vmem:[#allocation2] sm:$0xff] %v21
  %38 = vst [vmem:[#allocation2 + $0x8] sm:$0xff] %v22
  %39 = vst [vmem:[#allocation2 + $0x10] sm:$0xff] %v23
  %40 = vst [vmem:[#allocation2 + $0x18] sm:$0xff] %v24
  %41 = vst [vmem:[#allocation2 + $0x20] sm:$0xff] %v25
  %42 = vst [vmem:[#allocation2 + $0x28] sm:$0xff] %v26
  %43 = vst [vmem:[#allocation2 + $0x30] sm:$0xff] %v27
  %44 = vst [vmem:[#allocation2 + $0x38] sm:$0xff] %v28
  %45 = vst [vmem:[#allocation2 + $0x40] sm:$0xff] %v29
  %46 = vst [vmem:[#allocation2 + $0x48] sm:$0xff] %v30
  %47 = vst [vmem:[#allocation2 + $0x50] sm:$0xff] %v31
  %48 = vst [vmem:[#allocation2 + $0x58] sm:$0xff] %v32
  %49 = vst [vmem:[#allocation2 + $0x60] sm:$0xff] %v33
  %50 = vst [vmem:[#allocation2 + $0x68] sm:$0xff] %v34
  %51 = vst [vmem:[#allocation2 + $0x70] sm:$0xff] %v35
  %52 = vst [vmem:[#allocation2 + $0x78] sm:$0xff] %v36
  %v53 = vld [vmem:[#allocation2] sm:$0xff]
  %v54 = vld [vmem:[#allocation2 + $0x8] sm:$0xff]
  %v55 = vld [vmem:[#allocation2 + $0x10] sm:$0xff]
  %v56 = vld [vmem:[#allocation2 + $0x18] sm:$0xff]
  %v57 = vld [vmem:[#allocation2 + $0x20] sm:$0xff]
  %v58 = vld [vmem:[#allocation2 + $0x28] sm:$0xff]
  %v59 = vld [vmem:[#allocation2 + $0x30] sm:$0xff]
  %v60 = vld [vmem:[#allocation2 + $0x40] sm:$0xff]
  %v61 = vld [vmem:[#allocation2 + $0x48] sm:$0xff]
  %v62 = vld [vmem:[#allocation2 + $0x50] sm:$0xff]
  %v63 = vld [vmem:[#allocation2 + $0x58] sm:$0xff]
  %v64 = vld [vmem:[#allocation2 + $0x60] sm:$0xff]
  %v65 = vld [vmem:[#allocation2 + $0x68] sm:$0xff]
  %v66 = vld [vmem:[#allocation2 + $0x70] sm:$0xff]
  %81 = vrot.lane.b32.xlu0 %v53, 19
  %v82 = vpop.permute.xlu0 %81
  %83 = vrot.lane.b32.xlu0 %v54, 19
  %v84 = vpop.permute.xlu0 %83
  %85 = vrot.lane.b32.xlu0 %v55, 19
  %v86 = vpop.permute.xlu0 %85
  %87 = vrot.lane.b32.xlu0 %v56, 19
  %v88 = vpop.permute.xlu0 %87
  %89 = vrot.lane.b32.xlu0 %v57, 19
  %v90 = vpop.permute.xlu0 %89
  %91 = vrot.lane.b32.xlu0 %v58, 19
  %v92 = vpop.permute.xlu0 %91
  %93 = vrot.lane.b32.xlu0 %v59, 19
  %v94 = vpop.permute.xlu0 %93
  %95 = vrot.lane.b32.xlu0 %v60, 19
  %v96 = vpop.permute.xlu0 %95
  %97 = vrot.lane.b32.xlu0 %v61, 19
  %v98 = vpop.permute.xlu0 %97
  %99 = vrot.lane.b32.xlu0 %v62, 19
  %v100 = vpop.permute.xlu0 %99
  %101 = vrot.lane.b32.xlu0 %v63, 19
  %v102 = vpop.permute.xlu0 %101
  %103 = vrot.lane.b32.xlu0 %v64, 19
  %v104 = vpop.permute.xlu0 %103
  %105 = vrot.lane.b32.xlu0 %v65, 19
  %v106 = vpop.permute.xlu0 %105
  %107 = vrot.lane.b32.xlu0 %v66, 19
  %v108 = vpop.permute.xlu0 %107
  %vm109 = vcmask 154624
  %v110 = vsel %vm109, %v82, %v84
  %v111 = vsel %vm109, %v84, %v86
  %v112 = vsel %vm109, %v86, %v88
  %v113 = vsel %vm109, %v88, %v90
  %v114 = vsel %vm109, %v90, %v92
  %v115 = vsel %vm109, %v92, %v94
  %v116 = vsel %vm109, %v96, %v98
  %v117 = vsel %vm109, %v98, %v100
  %v118 = vsel %vm109, %v100, %v102
  %v119 = vsel %vm109, %v102, %v104
  %v120 = vsel %vm109, %v104, %v106
  %v121 = vsel %vm109, %v106, %v108
  %134 = vst [vmem:[#allocation3] sm:$0xff] %v110
  %135 = vst [vmem:[#allocation3 + $0x8] sm:$0xff] %v111
  %136 = vst [vmem:[#allocation3 + $0x10] sm:$0xff] %v112
  %137 = vst [vmem:[#allocation3 + $0x18] sm:$0xff] %v113
  %138 = vst [vmem:[#allocation3 + $0x20] sm:$0xff] %v114
  %139 = vst [vmem:[#allocation3 + $0x28] sm:$0xff] %v115
  %140 = vst [vmem:[#allocation3 + $0x30] sm:$0xff] %v116
  %141 = vst [vmem:[#allocation3 + $0x38] sm:$0xff] %v117
  %142 = vst [vmem:[#allocation3 + $0x40] sm:$0xff] %v118
  %143 = vst [vmem:[#allocation3 + $0x48] sm:$0xff] %v119
  %144 = vst [vmem:[#allocation3 + $0x50] sm:$0xff] %v120
  %145 = vst [vmem:[#allocation3 + $0x58] sm:$0xff] %v121
  %v146 = vld [vmem:[#allocation2] sm:$0xff]
  %v147 = vld [vmem:[#allocation2 + $0x8] sm:$0xff]
  %v148 = vld [vmem:[#allocation2 + $0x10] sm:$0xff]
  %v149 = vld [vmem:[#allocation2 + $0x18] sm:$0xff]
  %v150 = vld [vmem:[#allocation2 + $0x20] sm:$0xff]
  %v151 = vld [vmem:[#allocation2 + $0x28] sm:$0xff]
  %v152 = vld [vmem:[#allocation2 + $0x30] sm:$0xff]
  %v153 = vld [vmem:[#allocation2 + $0x40] sm:$0xff]
  %v154 = vld [vmem:[#allocation2 + $0x48] sm:$0xff]
  %v155 = vld [vmem:[#allocation2 + $0x50] sm:$0xff]
  %v156 = vld [vmem:[#allocation2 + $0x58] sm:$0xff]
  %v157 = vld [vmem:[#allocation2 + $0x60] sm:$0xff]
  %v158 = vld [vmem:[#allocation2 + $0x68] sm:$0xff]
  %v159 = vld [vmem:[#allocation2 + $0x70] sm:$0xff]
  %174 = vrot.lane.b32.xlu0 %v146, 18
  %v175 = vpop.permute.xlu0 %174
  %176 = vrot.lane.b32.xlu0 %v147, 18
  %v177 = vpop.permute.xlu0 %176
  %178 = vrot.lane.b32.xlu0 %v148, 18
  %v179 = vpop.permute.xlu0 %178
  %180 = vrot.lane.b32.xlu0 %v149, 18
  %v181 = vpop.permute.xlu0 %180
  %182 = vrot.lane.b32.xlu0 %v150, 18
  %v183 = vpop.permute.xlu0 %182
  %184 = vrot.lane.b32.xlu0 %v151, 18
  %v185 = vpop.permute.xlu0 %184
  %186 = vrot.lane.b32.xlu0 %v152, 18
  %v187 = vpop.permute.xlu0 %186
  %188 = vrot.lane.b32.xlu0 %v153, 18
  %v189 = vpop.permute.xlu0 %188
  %190 = vrot.lane.b32.xlu0 %v154, 18
  %v191 = vpop.permute.xlu0 %190
  %192 = vrot.lane.b32.xlu0 %v155, 18
  %v193 = vpop.permute.xlu0 %192
  %194 = vrot.lane.b32.xlu0 %v156, 18
  %v195 = vpop.permute.xlu0 %194
  %196 = vrot.lane.b32.xlu0 %v157, 18
  %v197 = vpop.permute.xlu0 %196
  %198 = vrot.lane.b32.xlu0 %v158, 18
  %v199 = vpop.permute.xlu0 %198
  %200 = vrot.lane.b32.xlu0 %v159, 18
  %v201 = vpop.permute.xlu0 %200
  %vm202 = vcmask 146432
  %v203 = vsel %vm202, %v175, %v177
  %v204 = vsel %vm202, %v177, %v179
  %v205 = vsel %vm202, %v179, %v181
  %v206 = vsel %vm202, %v181, %v183
  %v207 = vsel %vm202, %v183, %v185
  %v208 = vsel %vm202, %v185, %v187
  %v209 = vsel %vm202, %v189, %v191
  %v210 = vsel %vm202, %v191, %v193
  %v211 = vsel %vm202, %v193, %v195
  %v212 = vsel %vm202, %v195, %v197
  %v213 = vsel %vm202, %v197, %v199
  %v214 = vsel %vm202, %v199, %v201
  %227 = vst [vmem:[#allocation3 + $0x60] sm:$0xff] %v203
  %228 = vst [vmem:[#allocation3 + $0x68] sm:$0xff] %v204
  %229 = vst [vmem:[#allocation3 + $0x70] sm:$0xff] %v205
  %230 = vst [vmem:[#allocation3 + $0x78] sm:$0xff] %v206
  %231 = vst [vmem:[#allocation3 + $0x80] sm:$0xff] %v207
  %232 = vst [vmem:[#allocation3 + $0x88] sm:$0xff] %v208
  %233 = vst [vmem:[#allocation3 + $0x90] sm:$0xff] %v209
  %234 = vst [vmem:[#allocation3 + $0x98] sm:$0xff] %v210
  %235 = vst [vmem:[#allocation3 + $0xa0] sm:$0xff] %v211
  %236 = vst [vmem:[#allocation3 + $0xa8] sm:$0xff] %v212
  %237 = vst [vmem:[#allocation3 + $0xb0] sm:$0xff] %v213
  %238 = vst [vmem:[#allocation3 + $0xb8] sm:$0xff] %v214
  %v239 = vld [vmem:[#allocation2] sm:$0xff]
  %v240 = vld [vmem:[#allocation2 + $0x8] sm:$0xff]
  %v241 = vld [vmem:[#allocation2 + $0x10] sm:$0xff]
  %v242 = vld [vmem:[#allocation2 + $0x18] sm:$0xff]
  %v243 = vld [vmem:[#allocation2 + $0x20] sm:$0xff]
  %v244 = vld [vmem:[#allocation2 + $0x28] sm:$0xff]
  %v245 = vld [vmem:[#allocation2 + $0x30] sm:$0xff]
  %v246 = vld [vmem:[#allocation2 + $0x40] sm:$0xff]
  %v247 = vld [vmem:[#allocation2 + $0x48] sm:$0xff]
  %v248 = vld [vmem:[#allocation2 + $0x50] sm:$0xff]
  %v249 = vld [vmem:[#allocation2 + $0x58] sm:$0xff]
  %v250 = vld [vmem:[#allocation2 + $0x60] sm:$0xff]
  %v251 = vld [vmem:[#allocation2 + $0x68] sm:$0xff]
  %v252 = vld [vmem:[#allocation2 + $0x70] sm:$0xff]
  %267 = vrot.lane.b32.xlu0 %v239, 17
  %v268 = vpop.permute.xlu0 %267
  %269 = vrot.lane.b32.xlu0 %v240, 17
  %v270 = vpop.permute.xlu0 %269
  %271 = vrot.lane.b32.xlu0 %v241, 17
  %v272 = vpop.permute.xlu0 %271
  %273 = vrot.lane.b32.xlu0 %v242, 17
  %v274 = vpop.permute.xlu0 %273
  %275 = vrot.lane.b32.xlu0 %v243, 17
  %v276 = vpop.permute.xlu0 %275
  %277 = vrot.lane.b32.xlu0 %v244, 17
  %v278 = vpop.permute.xlu0 %277
  %279 = vrot.lane.b32.xlu0 %v245, 17
  %v280 = vpop.permute.xlu0 %279
  %281 = vrot.lane.b32.xlu0 %v246, 17
  %v282 = vpop.permute.xlu0 %281
  %283 = vrot.lane.b32.xlu0 %v247, 17
  %v284 = vpop.permute.xlu0 %283
  %285 = vrot.lane.b32.xlu0 %v248, 17
  %v286 = vpop.permute.xlu0 %285
  %287 = vrot.lane.b32.xlu0 %v249, 17
  %v288 = vpop.permute.xlu0 %287
  %289 = vrot.lane.b32.xlu0 %v250, 17
  %v290 = vpop.permute.xlu0 %289
  %291 = vrot.lane.b32.xlu0 %v251, 17
  %v292 = vpop.permute.xlu0 %291
  %293 = vrot.lane.b32.xlu0 %v252, 17
  %v294 = vpop.permute.xlu0 %293
  %vm295 = vcmask 138240
  %v296 = vsel %vm295, %v268, %v270
  %v297 = vsel %vm295, %v270, %v272
  %v298 = vsel %vm295, %v272, %v274
  %v299 = vsel %vm295, %v274, %v276
  %v300 = vsel %vm295, %v276, %v278
  %v301 = vsel %vm295, %v278, %v280
  %v302 = vsel %vm295, %v282, %v284
  %v303 = vsel %vm295, %v284, %v286
  %v304 = vsel %vm295, %v286, %v288
  %v305 = vsel %vm295, %v288, %v290
  %v306 = vsel %vm295, %v290, %v292
  %v307 = vsel %vm295, %v292, %v294
  %320 = vst [vmem:[#allocation3 + $0xc0] sm:$0xff] %v296
  %321 = vst [vmem:[#allocation3 + $0xc8] sm:$0xff] %v297
  %322 = vst [vmem:[#allocation3 + $0xd0] sm:$0xff] %v298
  %323 = vst [vmem:[#allocation3 + $0xd8] sm:$0xff] %v299
  %324 = vst [vmem:[#allocation3 + $0xe0] sm:$0xff] %v300
  %325 = vst [vmem:[#allocation3 + $0xe8] sm:$0xff] %v301
  %326 = vst [vmem:[#allocation3 + $0xf0] sm:$0xff] %v302
  %327 = vst [vmem:[#allocation3 + $0xf8] sm:$0xff] %v303
  %328 = vst [vmem:[#allocation3 + $0x100] sm:$0xff] %v304
  %329 = vst [vmem:[#allocation3 + $0x108] sm:$0xff] %v305
  %330 = vst [vmem:[#allocation3 + $0x110] sm:$0xff] %v306
  %331 = vst [vmem:[#allocation3 + $0x118] sm:$0xff] %v307
  %v332 = vld [vmem:[#allocation2] sm:$0xff]
  %v333 = vld [vmem:[#allocation2 + $0x8] sm:$0xff]
  %v334 = vld [vmem:[#allocation2 + $0x10] sm:$0xff]
  %v335 = vld [vmem:[#allocation2 + $0x18] sm:$0xff]
  %v336 = vld [vmem:[#allocation2 + $0x20] sm:$0xff]
  %v337 = vld [vmem:[#allocation2 + $0x28] sm:$0xff]
  %v338 = vld [vmem:[#allocation2 + $0x30] sm:$0xff]
  %v339 = vld [vmem:[#allocation2 + $0x40] sm:$0xff]
  %v340 = vld [vmem:[#allocation2 + $0x48] sm:$0xff]
  %v341 = vld [vmem:[#allocation2 + $0x50] sm:$0xff]
  %v342 = vld [vmem:[#allocation2 + $0x58] sm:$0xff]
  %v343 = vld [vmem:[#allocation2 + $0x60] sm:$0xff]
  %v344 = vld [vmem:[#allocation2 + $0x68] sm:$0xff]
  %v345 = vld [vmem:[#allocation2 + $0x70] sm:$0xff]
  %360 = vrot.lane.b32.xlu0 %v332, 1
  %v361 = vpop.permute.xlu0 %360
  %362 = vrot.lane.b32.xlu0 %v333, 1
  %v363 = vpop.permute.xlu0 %362
  %364 = vrot.lane.b32.xlu0 %v334, 1
  %v365 = vpop.permute.xlu0 %364
  %366 = vrot.lane.b32.xlu0 %v335, 1
  %v367 = vpop.permute.xlu0 %366
  %368 = vrot.lane.b32.xlu0 %v336, 1
  %v369 = vpop.permute.xlu0 %368
  %370 = vrot.lane.b32.xlu0 %v337, 1
  %v371 = vpop.permute.xlu0 %370
  %372 = vrot.lane.b32.xlu0 %v338, 1
  %v373 = vpop.permute.xlu0 %372
  %374 = vrot.lane.b32.xlu0 %v339, 1
  %v375 = vpop.permute.xlu0 %374
  %376 = vrot.lane.b32.xlu0 %v340, 1
  %v377 = vpop.permute.xlu0 %376
  %378 = vrot.lane.b32.xlu0 %v341, 1
  %v379 = vpop.permute.xlu0 %378
  %380 = vrot.lane.b32.xlu0 %v342, 1
  %v381 = vpop.permute.xlu0 %380
  %382 = vrot.lane.b32.xlu0 %v343, 1
  %v383 = vpop.permute.xlu0 %382
  %384 = vrot.lane.b32.xlu0 %v344, 1
  %v385 = vpop.permute.xlu0 %384
  %386 = vrot.lane.b32.xlu0 %v345, 1
  %v387 = vpop.permute.xlu0 %386
  %vm388 = vcmask 7168
  %v389 = vsel %vm388, %v361, %v363
  %v390 = vsel %vm388, %v363, %v365
  %v391 = vsel %vm388, %v365, %v367
  %v392 = vsel %vm388, %v367, %v369
  %v393 = vsel %vm388, %v369, %v371
  %v394 = vsel %vm388, %v371, %v373
  %v395 = vsel %vm388, %v375, %v377
  %v396 = vsel %vm388, %v377, %v379
  %v397 = vsel %vm388, %v379, %v381
  %v398 = vsel %vm388, %v381, %v383
  %v399 = vsel %vm388, %v383, %v385
  %v400 = vsel %vm388, %v385, %v387
  %413 = vst [vmem:[#allocation3 + $0x120] sm:$0xff] %v389
  %414 = vst [vmem:[#allocation3 + $0x128] sm:$0xff] %v390
  %415 = vst [vmem:[#allocation3 + $0x130] sm:$0xff] %v391
  %416 = vst [vmem:[#allocation3 + $0x138] sm:$0xff] %v392
  %417 = vst [vmem:[#allocation3 + $0x140] sm:$0xff] %v393
  %418 = vst [vmem:[#allocation3 + $0x148] sm:$0xff] %v394
  %419 = vst [vmem:[#allocation3 + $0x150] sm:$0xff] %v395
  %420 = vst [vmem:[#allocation3 + $0x158] sm:$0xff] %v396
  %421 = vst [vmem:[#allocation3 + $0x160] sm:$0xff] %v397
  %422 = vst [vmem:[#allocation3 + $0x168] sm:$0xff] %v398
  %423 = vst [vmem:[#allocation3 + $0x170] sm:$0xff] %v399
  %424 = vst [vmem:[#allocation3 + $0x178] sm:$0xff] %v400
  %v425 = vld [vmem:[#allocation2 + $0x8] sm:$0xff]
  %v426 = vld [vmem:[#allocation2 + $0x10] sm:$0xff]
  %v427 = vld [vmem:[#allocation2 + $0x18] sm:$0xff]
  %v428 = vld [vmem:[#allocation2 + $0x20] sm:$0xff]
  %v429 = vld [vmem:[#allocation2 + $0x28] sm:$0xff]
  %v430 = vld [vmem:[#allocation2 + $0x30] sm:$0xff]
  %v431 = vld [vmem:[#allocation2 + $0x48] sm:$0xff]
  %v432 = vld [vmem:[#allocation2 + $0x50] sm:$0xff]
  %v433 = vld [vmem:[#allocation2 + $0x58] sm:$0xff]
  %v434 = vld [vmem:[#allocation2 + $0x60] sm:$0xff]
  %v435 = vld [vmem:[#allocation2 + $0x68] sm:$0xff]
  %v436 = vld [vmem:[#allocation2 + $0x70] sm:$0xff]
  %437 = vst [vmem:[#allocation3 + $0x180] sm:$0xff] %v425
  %438 = vst [vmem:[#allocation3 + $0x188] sm:$0xff] %v426
  %439 = vst [vmem:[#allocation3 + $0x190] sm:$0xff] %v427
  %440 = vst [vmem:[#allocation3 + $0x198] sm:$0xff] %v428
  %441 = vst [vmem:[#allocation3 + $0x1a0] sm:$0xff] %v429
  %442 = vst [vmem:[#allocation3 + $0x1a8] sm:$0xff] %v430
  %443 = vst [vmem:[#allocation3 + $0x1b0] sm:$0xff] %v431
  %444 = vst [vmem:[#allocation3 + $0x1b8] sm:$0xff] %v432
  %445 = vst [vmem:[#allocation3 + $0x1c0] sm:$0xff] %v433
  %446 = vst [vmem:[#allocation3 + $0x1c8] sm:$0xff] %v434
  %447 = vst [vmem:[#allocation3 + $0x1d0] sm:$0xff] %v435
  %448 = vst [vmem:[#allocation3 + $0x1d8] sm:$0xff] %v436
  %v449 = vld [vmem:[#allocation2 + $0x8] sm:$0xff]
  %v450 = vld [vmem:[#allocation2 + $0x10] sm:$0xff]
  %v451 = vld [vmem:[#allocation2 + $0x18] sm:$0xff]
  %v452 = vld [vmem:[#allocation2 + $0x20] sm:$0xff]
  %v453 = vld [vmem:[#allocation2 + $0x28] sm:$0xff]
  %v454 = vld [vmem:[#allocation2 + $0x30] sm:$0xff]
  %v455 = vld [vmem:[#allocation2 + $0x38] sm:$0xff]
  %v456 = vld [vmem:[#allocation2 + $0x48] sm:$0xff]
  %v457 = vld [vmem:[#allocation2 + $0x50] sm:$0xff]
  %v458 = vld [vmem:[#allocation2 + $0x58] sm:$0xff]
  %v459 = vld [vmem:[#allocation2 + $0x60] sm:$0xff]
  %v460 = vld [vmem:[#allocation2 + $0x68] sm:$0xff]
  %v461 = vld [vmem:[#allocation2 + $0x70] sm:$0xff]
  %v462 = vld [vmem:[#allocation2 + $0x78] sm:$0xff]
  %477 = vrot.lane.b32.xlu0 %v449, 127
  %v478 = vpop.permute.xlu0 %477
  %479 = vrot.lane.b32.xlu0 %v450, 127
  %v480 = vpop.permute.xlu0 %479
  %481 = vrot.lane.b32.xlu0 %v451, 127
  %v482 = vpop.permute.xlu0 %481
  %483 = vrot.lane.b32.xlu0 %v452, 127
  %v484 = vpop.permute.xlu0 %483
  %485 = vrot.lane.b32.xlu0 %v453, 127
  %v486 = vpop.permute.xlu0 %485
  %487 = vrot.lane.b32.xlu0 %v454, 127
  %v488 = vpop.permute.xlu0 %487
  %489 = vrot.lane.b32.xlu0 %v455, 127
  %v490 = vpop.permute.xlu0 %489
  %491 = vrot.lane.b32.xlu0 %v456, 127
  %v492 = vpop.permute.xlu0 %491
  %493 = vrot.lane.b32.xlu0 %v457, 127
  %v494 = vpop.permute.xlu0 %493
  %495 = vrot.lane.b32.xlu0 %v458, 127
  %v496 = vpop.permute.xlu0 %495
  %497 = vrot.lane.b32.xlu0 %v459, 127
  %v498 = vpop.permute.xlu0 %497
  %499 = vrot.lane.b32.xlu0 %v460, 127
  %v500 = vpop.permute.xlu0 %499
  %501 = vrot.lane.b32.xlu0 %v461, 127
  %v502 = vpop.permute.xlu0 %501
  %503 = vrot.lane.b32.xlu0 %v462, 127
  %v504 = vpop.permute.xlu0 %503
  %vm505 = vcmask 1039360
  %v506 = vsel %vm505, %v478, %v480
  %v507 = vsel %vm505, %v480, %v482
  %v508 = vsel %vm505, %v482, %v484
  %v509 = vsel %vm505, %v484, %v486
  %v510 = vsel %vm505, %v486, %v488
  %v511 = vsel %vm505, %v488, %v490
  %v512 = vsel %vm505, %v492, %v494
  %v513 = vsel %vm505, %v494, %v496
  %v514 = vsel %vm505, %v496, %v498
  %v515 = vsel %vm505, %v498, %v500
  %v516 = vsel %vm505, %v500, %v502
  %v517 = vsel %vm505, %v502, %v504
  %530 = vst [vmem:[#allocation3 + $0x1e0] sm:$0xff] %v506
  %531 = vst [vmem:[#allocation3 + $0x1e8] sm:$0xff] %v507
  %532 = vst [vmem:[#allocation3 + $0x1f0] sm:$0xff] %v508
  %533 = vst [vmem:[#allocation3 + $0x1f8] sm:$0xff] %v509
  %534 = vst [vmem:[#allocation3 + $0x200] sm:$0xff] %v510
  %535 = vst [vmem:[#allocation3 + $0x208] sm:$0xff] %v511
  %536 = vst [vmem:[#allocation3 + $0x210] sm:$0xff] %v512
  %537 = vst [vmem:[#allocation3 + $0x218] sm:$0xff] %v513
  %538 = vst [vmem:[#allocation3 + $0x220] sm:$0xff] %v514
  %539 = vst [vmem:[#allocation3 + $0x228] sm:$0xff] %v515
  %540 = vst [vmem:[#allocation3 + $0x230] sm:$0xff] %v516
  %541 = vst [vmem:[#allocation3 + $0x238] sm:$0xff] %v517
  %v542 = vld [vmem:[#allocation2 + $0x8] sm:$0xff]
  %v543 = vld [vmem:[#allocation2 + $0x10] sm:$0xff]
  %v544 = vld [vmem:[#allocation2 + $0x18] sm:$0xff]
  %v545 = vld [vmem:[#allocation2 + $0x20] sm:$0xff]
  %v546 = vld [vmem:[#allocation2 + $0x28] sm:$0xff]
  %v547 = vld [vmem:[#allocation2 + $0x30] sm:$0xff]
  %v548 = vld [vmem:[#allocation2 + $0x38] sm:$0xff]
  %v549 = vld [vmem:[#allocation2 + $0x48] sm:$0xff]
  %v550 = vld [vmem:[#allocation2 + $0x50] sm:$0xff]
  %v551 = vld [vmem:[#allocation2 + $0x58] sm:$0xff]
  %v552 = vld [vmem:[#allocation2 + $0x60] sm:$0xff]
  %v553 = vld [vmem:[#allocation2 + $0x68] sm:$0xff]
  %v554 = vld [vmem:[#allocation2 + $0x70] sm:$0xff]
  %v555 = vld [vmem:[#allocation2 + $0x78] sm:$0xff]
  %570 = vrot.lane.b32.xlu0 %v542, 111
  %v571 = vpop.permute.xlu0 %570
  %572 = vrot.lane.b32.xlu0 %v543, 111
  %v573 = vpop.permute.xlu0 %572
  %574 = vrot.lane.b32.xlu0 %v544, 111
  %v575 = vpop.permute.xlu0 %574
  %576 = vrot.lane.b32.xlu0 %v545, 111
  %v577 = vpop.permute.xlu0 %576
  %578 = vrot.lane.b32.xlu0 %v546, 111
  %v579 = vpop.permute.xlu0 %578
  %580 = vrot.lane.b32.xlu0 %v547, 111
  %v581 = vpop.permute.xlu0 %580
  %582 = vrot.lane.b32.xlu0 %v548, 111
  %v583 = vpop.permute.xlu0 %582
  %584 = vrot.lane.b32.xlu0 %v549, 111
  %v585 = vpop.permute.xlu0 %584
  %586 = vrot.lane.b32.xlu0 %v550, 111
  %v587 = vpop.permute.xlu0 %586
  %588 = vrot.lane.b32.xlu0 %v551, 111
  %v589 = vpop.permute.xlu0 %588
  %590 = vrot.lane.b32.xlu0 %v552, 111
  %v591 = vpop.permute.xlu0 %590
  %592 = vrot.lane.b32.xlu0 %v553, 111
  %v593 = vpop.permute.xlu0 %592
  %594 = vrot.lane.b32.xlu0 %v554, 111
  %v595 = vpop.permute.xlu0 %594
  %596 = vrot.lane.b32.xlu0 %v555, 111
  %v597 = vpop.permute.xlu0 %596
  %vm598 = vcmask 908288
  %v599 = vsel %vm598, %v571, %v573
  %v600 = vsel %vm598, %v573, %v575
  %v601 = vsel %vm598, %v575, %v577
  %v602 = vsel %vm598, %v577, %v579
  %v603 = vsel %vm598, %v579, %v581
  %v604 = vsel %vm598, %v581, %v583
  %v605 = vsel %vm598, %v585, %v587
  %v606 = vsel %vm598, %v587, %v589
  %v607 = vsel %vm598, %v589, %v591
  %v608 = vsel %vm598, %v591, %v593
  %v609 = vsel %vm598, %v593, %v595
  %v610 = vsel %vm598, %v595, %v597
  %623 = vst [vmem:[#allocation3 + $0x240] sm:$0xff] %v599
  %624 = vst [vmem:[#allocation3 + $0x248] sm:$0xff] %v600
  %625 = vst [vmem:[#allocation3 + $0x250] sm:$0xff] %v601
  %626 = vst [vmem:[#allocation3 + $0x258] sm:$0xff] %v602
  %627 = vst [vmem:[#allocation3 + $0x260] sm:$0xff] %v603
  %628 = vst [vmem:[#allocation3 + $0x268] sm:$0xff] %v604
  %629 = vst [vmem:[#allocation3 + $0x270] sm:$0xff] %v605
  %630 = vst [vmem:[#allocation3 + $0x278] sm:$0xff] %v606
  %631 = vst [vmem:[#allocation3 + $0x280] sm:$0xff] %v607
  %632 = vst [vmem:[#allocation3 + $0x288] sm:$0xff] %v608
  %633 = vst [vmem:[#allocation3 + $0x290] sm:$0xff] %v609
  %634 = vst [vmem:[#allocation3 + $0x298] sm:$0xff] %v610
  %v635 = vld [vmem:[#allocation2 + $0x8] sm:$0xff]
  %v636 = vld [vmem:[#allocation2 + $0x10] sm:$0xff]
  %v637 = vld [vmem:[#allocation2 + $0x18] sm:$0xff]
  %v638 = vld [vmem:[#allocation2 + $0x20] sm:$0xff]
  %v639 = vld [vmem:[#allocation2 + $0x28] sm:$0xff]
  %v640 = vld [vmem:[#allocation2 + $0x30] sm:$0xff]
  %v641 = vld [vmem:[#allocation2 + $0x38] sm:$0xff]
  %v642 = vld [vmem:[#allocation2 + $0x48] sm:$0xff]
  %v643 = vld [vmem:[#allocation2 + $0x50] sm:$0xff]
  %v644 = vld [vmem:[#allocation2 + $0x58] sm:$0xff]
  %v645 = vld [vmem:[#allocation2 + $0x60] sm:$0xff]
  %v646 = vld [vmem:[#allocation2 + $0x68] sm:$0xff]
  %v647 = vld [vmem:[#allocation2 + $0x70] sm:$0xff]
  %v648 = vld [vmem:[#allocation2 + $0x78] sm:$0xff]
  %663 = vrot.lane.b32.xlu0 %v635, 110
  %v664 = vpop.permute.xlu0 %663
  %665 = vrot.lane.b32.xlu0 %v636, 110
  %v666 = vpop.permute.xlu0 %665
  %667 = vrot.lane.b32.xlu0 %v637, 110
  %v668 = vpop.permute.xlu0 %667
  %669 = vrot.lane.b32.xlu0 %v638, 110
  %v670 = vpop.permute.xlu0 %669
  %671 = vrot.lane.b32.xlu0 %v639, 110
  %v672 = vpop.permute.xlu0 %671
  %673 = vrot.lane.b32.xlu0 %v640, 110
  %v674 = vpop.permute.xlu0 %673
  %675 = vrot.lane.b32.xlu0 %v641, 110
  %v676 = vpop.permute.xlu0 %675
  %677 = vrot.lane.b32.xlu0 %v642, 110
  %v678 = vpop.permute.xlu0 %677
  %679 = vrot.lane.b32.xlu0 %v643, 110
  %v680 = vpop.permute.xlu0 %679
  %681 = vrot.lane.b32.xlu0 %v644, 110
  %v682 = vpop.permute.xlu0 %681
  %683 = vrot.lane.b32.xlu0 %v645, 110
  %v684 = vpop.permute.xlu0 %683
  %685 = vrot.lane.b32.xlu0 %v646, 110
  %v686 = vpop.permute.xlu0 %685
  %687 = vrot.lane.b32.xlu0 %v647, 110
  %v688 = vpop.permute.xlu0 %687
  %689 = vrot.lane.b32.xlu0 %v648, 110
  %v690 = vpop.permute.xlu0 %689
  %vm691 = vcmask 900096
  %v692 = vsel %vm691, %v664, %v666
  %v693 = vsel %vm691, %v666, %v668
  %v694 = vsel %vm691, %v668, %v670
  %v695 = vsel %vm691, %v670, %v672
  %v696 = vsel %vm691, %v672, %v674
  %v697 = vsel %vm691, %v674, %v676
  %v698 = vsel %vm691, %v678, %v680
  %v699 = vsel %vm691, %v680, %v682
  %v700 = vsel %vm691, %v682, %v684
  %v701 = vsel %vm691, %v684, %v686
  %v702 = vsel %vm691, %v686, %v688
  %v703 = vsel %vm691, %v688, %v690
  %716 = vst [vmem:[#allocation3 + $0x2a0] sm:$0xff] %v692
  %717 = vst [vmem:[#allocation3 + $0x2a8] sm:$0xff] %v693
  %718 = vst [vmem:[#allocation3 + $0x2b0] sm:$0xff] %v694
  %719 = vst [vmem:[#allocation3 + $0x2b8] sm:$0xff] %v695
  %720 = vst [vmem:[#allocation3 + $0x2c0] sm:$0xff] %v696
  %721 = vst [vmem:[#allocation3 + $0x2c8] sm:$0xff] %v697
  %722 = vst [vmem:[#allocation3 + $0x2d0] sm:$0xff] %v698
  %723 = vst [vmem:[#allocation3 + $0x2d8] sm:$0xff] %v699
  %724 = vst [vmem:[#allocation3 + $0x2e0] sm:$0xff] %v700
  %725 = vst [vmem:[#allocation3 + $0x2e8] sm:$0xff] %v701
  %726 = vst [vmem:[#allocation3 + $0x2f0] sm:$0xff] %v702
  %727 = vst [vmem:[#allocation3 + $0x2f8] sm:$0xff] %v703
  %v728 = vld [vmem:[#allocation2 + $0x8] sm:$0xff]
  %v729 = vld [vmem:[#allocation2 + $0x10] sm:$0xff]
  %v730 = vld [vmem:[#allocation2 + $0x18] sm:$0xff]
  %v731 = vld [vmem:[#allocation2 + $0x20] sm:$0xff]
  %v732 = vld [vmem:[#allocation2 + $0x28] sm:$0xff]
  %v733 = vld [vmem:[#allocation2 + $0x30] sm:$0xff]
  %v734 = vld [vmem:[#allocation2 + $0x38] sm:$0xff]
  %v735 = vld [vmem:[#allocation2 + $0x48] sm:$0xff]
  %v736 = vld [vmem:[#allocation2 + $0x50] sm:$0xff]
  %v737 = vld [vmem:[#allocation2 + $0x58] sm:$0xff]
  %v738 = vld [vmem:[#allocation2 + $0x60] sm:$0xff]
  %v739 = vld [vmem:[#allocation2 + $0x68] sm:$0xff]
  %v740 = vld [vmem:[#allocation2 + $0x70] sm:$0xff]
  %v741 = vld [vmem:[#allocation2 + $0x78] sm:$0xff]
  %756 = vrot.lane.b32.xlu0 %v728, 109
  %v757 = vpop.permute.xlu0 %756
  %758 = vrot.lane.b32.xlu0 %v729, 109
  %v759 = vpop.permute.xlu0 %758
  %760 = vrot.lane.b32.xlu0 %v730, 109
  %v761 = vpop.permute.xlu0 %760
  %762 = vrot.lane.b32.xlu0 %v731, 109
  %v763 = vpop.permute.xlu0 %762
  %764 = vrot.lane.b32.xlu0 %v732, 109
  %v765 = vpop.permute.xlu0 %764
  %766 = vrot.lane.b32.xlu0 %v733, 109
  %v767 = vpop.permute.xlu0 %766
  %768 = vrot.lane.b32.xlu0 %v734, 109
  %v769 = vpop.permute.xlu0 %768
  %770 = vrot.lane.b32.xlu0 %v735, 109
  %v771 = vpop.permute.xlu0 %770
  %772 = vrot.lane.b32.xlu0 %v736, 109
  %v773 = vpop.permute.xlu0 %772
  %774 = vrot.lane.b32.xlu0 %v737, 109
  %v775 = vpop.permute.xlu0 %774
  %776 = vrot.lane.b32.xlu0 %v738, 109
  %v777 = vpop.permute.xlu0 %776
  %778 = vrot.lane.b32.xlu0 %v739, 109
  %v779 = vpop.permute.xlu0 %778
  %780 = vrot.lane.b32.xlu0 %v740, 109
  %v781 = vpop.permute.xlu0 %780
  %782 = vrot.lane.b32.xlu0 %v741, 109
  %v783 = vpop.permute.xlu0 %782
  %vm784 = vcmask 891904
  %v785 = vsel %vm784, %v757, %v759
  %v786 = vsel %vm784, %v759, %v761
  %v787 = vsel %vm784, %v761, %v763
  %v788 = vsel %vm784, %v763, %v765
  %v789 = vsel %vm784, %v765, %v767
  %v790 = vsel %vm784, %v767, %v769
  %v791 = vsel %vm784, %v771, %v773
  %v792 = vsel %vm784, %v773, %v775
  %v793 = vsel %vm784, %v775, %v777
  %v794 = vsel %vm784, %v777, %v779
  %v795 = vsel %vm784, %v779, %v781
  %v796 = vsel %vm784, %v781, %v783
  %809 = vst [vmem:[#allocation3 + $0x300] sm:$0xff] %v785
  %810 = vst [vmem:[#allocation3 + $0x308] sm:$0xff] %v786
  %811 = vst [vmem:[#allocation3 + $0x310] sm:$0xff] %v787
  %812 = vst [vmem:[#allocation3 + $0x318] sm:$0xff] %v788
  %813 = vst [vmem:[#allocation3 + $0x320] sm:$0xff] %v789
  %814 = vst [vmem:[#allocation3 + $0x328] sm:$0xff] %v790
  %815 = vst [vmem:[#allocation3 + $0x330] sm:$0xff] %v791
  %816 = vst [vmem:[#allocation3 + $0x338] sm:$0xff] %v792
  %817 = vst [vmem:[#allocation3 + $0x340] sm:$0xff] %v793
  %818 = vst [vmem:[#allocation3 + $0x348] sm:$0xff] %v794
  %819 = vst [vmem:[#allocation3 + $0x350] sm:$0xff] %v795
  %820 = vst [vmem:[#allocation3 + $0x358] sm:$0xff] %v796
  %v821 = vld [vmem:[%s2] sm:$0xff]
  %v822 = vld [vmem:[%s2 + $0x8] sm:$0xff]
  %v823 = vld [vmem:[%s2 + $0x10] sm:$0xff]
  %v824 = vld [vmem:[%s2 + $0x18] sm:$0xff]
  %v825 = vld [vmem:[#allocation3] sm:$0xff]
  %v826 = vld [vmem:[#allocation3 + $0x8] sm:$0xff]
  %v827 = vld [vmem:[#allocation3 + $0x10] sm:$0xff]
  %v828 = vld [vmem:[#allocation3 + $0x18] sm:$0xff]
  %v829 = vld [vmem:[#allocation3 + $0x20] sm:$0xff]
  %v830 = vld [vmem:[#allocation3 + $0x28] sm:$0xff]
  %v831 = vld [vmem:[#allocation3 + $0x30] sm:$0xff]
  %v832 = vld [vmem:[#allocation3 + $0x38] sm:$0xff]
  %v833 = vld [vmem:[#allocation3 + $0x40] sm:$0xff]
  %v834 = vld [vmem:[#allocation3 + $0x48] sm:$0xff]
  %v835 = vld [vmem:[#allocation3 + $0x50] sm:$0xff]
  %v836 = vld [vmem:[#allocation3 + $0x58] sm:$0xff]
  %v837 = vld [vmem:[#allocation3 + $0x60] sm:$0xff]
  %v838 = vld [vmem:[#allocation3 + $0x68] sm:$0xff]
  %v839 = vld [vmem:[#allocation3 + $0x70] sm:$0xff]
  %v840 = vld [vmem:[#allocation3 + $0x78] sm:$0xff]
  %v841 = vld [vmem:[#allocation3 + $0x80] sm:$0xff]
  %v842 = vld [vmem:[#allocation3 + $0x88] sm:$0xff]
  %v843 = vld [vmem:[#allocation3 + $0x90] sm:$0xff]
  %v844 = vld [vmem:[#allocation3 + $0x98] sm:$0xff]
  %v845 = vld [vmem:[#allocation3 + $0xa0] sm:$0xff]
  %v846 = vld [vmem:[#allocation3 + $0xa8] sm:$0xff]
  %v847 = vld [vmem:[#allocation3 + $0xb0] sm:$0xff]
  %v848 = vld [vmem:[#allocation3 + $0xb8] sm:$0xff]
  %v849 = vld [vmem:[#allocation3 + $0xc0] sm:$0xff]
  %v850 = vld [vmem:[#allocation3 + $0xc8] sm:$0xff]
  %v851 = vld [vmem:[#allocation3 + $0xd0] sm:$0xff]
  %v852 = vld [vmem:[#allocation3 + $0xd8] sm:$0xff]
  %v853 = vld [vmem:[#allocation3 + $0xe0] sm:$0xff]
  %v854 = vld [vmem:[#allocation3 + $0xe8] sm:$0xff]
  %v855 = vld [vmem:[#allocation3 + $0xf0] sm:$0xff]
  %v856 = vld [vmem:[#allocation3 + $0xf8] sm:$0xff]
  %v857 = vld [vmem:[#allocation3 + $0x100] sm:$0xff]
  %v858 = vld [vmem:[#allocation3 + $0x108] sm:$0xff]
  %v859 = vld [vmem:[#allocation3 + $0x110] sm:$0xff]
  %v860 = vld [vmem:[#allocation3 + $0x118] sm:$0xff]
  %v861 = vld [vmem:[#allocation3 + $0x120] sm:$0xff]
  %v862 = vld [vmem:[#allocation3 + $0x128] sm:$0xff]
  %v863 = vld [vmem:[#allocation3 + $0x130] sm:$0xff]
  %v864 = vld [vmem:[#allocation3 + $0x138] sm:$0xff]
  %v865 = vld [vmem:[#allocation3 + $0x140] sm:$0xff]
  %v866 = vld [vmem:[#allocation3 + $0x148] sm:$0xff]
  %v867 = vld [vmem:[#allocation3 + $0x150] sm:$0xff]
  %v868 = vld [vmem:[#allocation3 + $0x158] sm:$0xff]
  %v869 = vld [vmem:[#allocation3 + $0x160] sm:$0xff]
  %v870 = vld [vmem:[#allocation3 + $0x168] sm:$0xff]
  %v871 = vld [vmem:[#allocation3 + $0x170] sm:$0xff]
  %v872 = vld [vmem:[#allocation3 + $0x178] sm:$0xff]
  %v873 = vld [vmem:[#allocation3 + $0x180] sm:$0xff]
  %v874 = vld [vmem:[#allocation3 + $0x188] sm:$0xff]
  %v875 = vld [vmem:[#allocation3 + $0x190] sm:$0xff]
  %v876 = vld [vmem:[#allocation3 + $0x198] sm:$0xff]
  %v877 = vld [vmem:[#allocation3 + $0x1a0] sm:$0xff]
  %v878 = vld [vmem:[#allocation3 + $0x1a8] sm:$0xff]
  %v879 = vld [vmem:[#allocation3 + $0x1b0] sm:$0xff]
  %v880 = vld [vmem:[#allocation3 + $0x1b8] sm:$0xff]
  %v881 = vld [vmem:[#allocation3 + $0x1c0] sm:$0xff]
  %v882 = vld [vmem:[#allocation3 + $0x1c8] sm:$0xff]
  %v883 = vld [vmem:[#allocation3 + $0x1d0] sm:$0xff]
  %v884 = vld [vmem:[#allocation3 + $0x1d8] sm:$0xff]
  %v885 = vld [vmem:[#allocation3 + $0x1e0] sm:$0xff]
  %v886 = vld [vmem:[#allocation3 + $0x1e8] sm:$0xff]
  %v887 = vld [vmem:[#allocation3 + $0x1f0] sm:$0xff]
  %v888 = vld [vmem:[#allocation3 + $0x1f8] sm:$0xff]
  %v889 = vld [vmem:[#allocation3 + $0x200] sm:$0xff]
  %v890 = vld [vmem:[#allocation3 + $0x208] sm:$0xff]
  %v891 = vld [vmem:[#allocation3 + $0x210] sm:$0xff]
  %v892 = vld [vmem:[#allocation3 + $0x218] sm:$0xff]
  %v893 = vld [vmem:[#allocation3 + $0x220] sm:$0xff]
  %v894 = vld [vmem:[#allocation3 + $0x228] sm:$0xff]
  %v895 = vld [vmem:[#allocation3 + $0x230] sm:$0xff]
  %v896 = vld [vmem:[#allocation3 + $0x238] sm:$0xff]
  %v897 = vld [vmem:[#allocation3 + $0x240] sm:$0xff]
  %v898 = vld [vmem:[#allocation3 + $0x248] sm:$0xff]
  %v899 = vld [vmem:[#allocation3 + $0x250] sm:$0xff]
  %v900 = vld [vmem:[#allocation3 + $0x258] sm:$0xff]
  %v901 = vld [vmem:[#allocation3 + $0x260] sm:$0xff]
  %v902 = vld [vmem:[#allocation3 + $0x268] sm:$0xff]
  %v903 = vld [vmem:[#allocation3 + $0x270] sm:$0xff]
  %v904 = vld [vmem:[#allocation3 + $0x278] sm:$0xff]
  %v905 = vld [vmem:[#allocation3 + $0x280] sm:$0xff]
  %v906 = vld [vmem:[#allocation3 + $0x288] sm:$0xff]
  %v907 = vld [vmem:[#allocation3 + $0x290] sm:$0xff]
  %v908 = vld [vmem:[#allocation3 + $0x298] sm:$0xff]
  %v909 = vld [vmem:[#allocation3 + $0x2a0] sm:$0xff]
  %v910 = vld [vmem:[#allocation3 + $0x2a8] sm:$0xff]
  %v911 = vld [vmem:[#allocation3 + $0x2b0] sm:$0xff]
  %v912 = vld [vmem:[#allocation3 + $0x2b8] sm:$0xff]
  %v913 = vld [vmem:[#allocation3 + $0x2c0] sm:$0xff]
  %v914 = vld [vmem:[#allocation3 + $0x2c8] sm:$0xff]
  %v915 = vld [vmem:[#allocation3 + $0x2d0] sm:$0xff]
  %v916 = vld [vmem:[#allocation3 + $0x2d8] sm:$0xff]
  %v917 = vld [vmem:[#allocation3 + $0x2e0] sm:$0xff]
  %v918 = vld [vmem:[#allocation3 + $0x2e8] sm:$0xff]
  %v919 = vld [vmem:[#allocation3 + $0x2f0] sm:$0xff]
  %v920 = vld [vmem:[#allocation3 + $0x2f8] sm:$0xff]
  %v921 = vld [vmem:[#allocation3 + $0x300] sm:$0xff]
  %v922 = vld [vmem:[#allocation3 + $0x308] sm:$0xff]
  %v923 = vld [vmem:[#allocation3 + $0x310] sm:$0xff]
  %v924 = vld [vmem:[#allocation3 + $0x318] sm:$0xff]
  %v925 = vld [vmem:[#allocation3 + $0x320] sm:$0xff]
  %v926 = vld [vmem:[#allocation3 + $0x328] sm:$0xff]
  %v927 = vld [vmem:[#allocation3 + $0x330] sm:$0xff]
  %v928 = vld [vmem:[#allocation3 + $0x338] sm:$0xff]
  %v929 = vld [vmem:[#allocation3 + $0x340] sm:$0xff]
  %v930 = vld [vmem:[#allocation3 + $0x348] sm:$0xff]
  %v931 = vld [vmem:[#allocation3 + $0x350] sm:$0xff]
  %v932 = vld [vmem:[#allocation3 + $0x358] sm:$0xff]
  %vm933 = vcmask 130048
  %v935 = vsel %vm933, %v822, 0
  %v938 = vsel %vm933, %v824, 0
  %940 = vmatprep.subr.mxu0 %v826
  %941 = vmatpush1.msra.mxu0 %v825
  %942 = vmatprep.subr.mxu0 %v832
  %943 = vmatpush1.msra.mxu0 %v831
  %944 = vmatprep.subr.mxu0 %v838
  %945 = vmatpush1.msra.mxu0 %v837
  %946 = vmatprep.subr.mxu0 %v844
  %947 = vmatpush1.msra.mxu0 %v843
  %948 = vmatprep.subr.mxu0 %v850
  %949 = vmatpush1.msra.mxu0 %v849
  %950 = vmatprep.subr.mxu0 %v856
  %951 = vmatpush1.msra.mxu0 %v855
  %952 = vmatprep.subr.mxu0 %v862
  %953 = vmatpush1.msra.mxu0 %v861
  %954 = vmatprep.subr.mxu0 %v868
  %955 = vmatpush1.msra.mxu0 %v867
  %956 = vmatprep.subr.mxu0 %v874
  %957 = vmatpush1.msra.mxu0 %v873
  %958 = vmatprep.subr.mxu0 %v880
  %959 = vmatpush1.msra.mxu0 %v879
  %960 = vmatprep.subr.mxu0 %v886
  %961 = vmatpush1.msra.mxu0 %v885
  %962 = vmatprep.subr.mxu0 %v892
  %963 = vmatpush1.msra.mxu0 %v891
  %964 = vmatprep.subr.mxu0 %v898
  %965 = vmatpush1.msra.mxu0 %v897
  %966 = vmatprep.subr.mxu0 %v904
  %967 = vmatpush1.msra.mxu0 %v903
  %968 = vmatprep.subr.mxu0 %v910
  %969 = vmatpush1.msra.mxu0 %v909
  %970 = vmatprep.subr.mxu0 %v916
  %971 = vmatpush1.msra.mxu0 %v915
  %972 = vmatprep.subr.mxu0 %v922
  %973 = vmatpush1.msra.mxu0 %v921
  %974 = vmatprep.subr.mxu0 %v928
  %975 = vmatpush1.msra.mxu0 %v927
  %976 = vmatprep.subr.mxu0 0.0
  %977 = vmatpush1.msra.mxu0 0.0
  %978 = vmatprep.subr.mxu0 0.0
  %979 = vmatpush1.msra.mxu0 0.0
  %980 = vmatprep.subr.mxu0 0.0
  %981 = vmatpush1.msra.mxu0 0.0
  %982 = vmatprep.subr.mxu0 0.0
  %983 = vmatpush1.msra.mxu0 0.0
  %984 = vmatprep.subr.mxu0 0.0
  %985 = vmatpush1.msra.mxu0 0.0
  %986 = vmatprep.subr.mxu0 0.0
  %987 = vmatpush1.msra.mxu0 0.0
  %988 = vmatprep.subr.mxu0 0.0
  %989 = vmatpush1.msra.mxu0 0.0
  %990 = vmatprep.subr.mxu0 0.0
  %991 = vmatpush1.msra.mxu0 0.0
  %992 = vmatprep.subr.mxu0 0.0
  %993 = vmatpush1.msra.mxu0 0.0
  %994 = vmatprep.subr.mxu0 0.0
  %995 = vmatpush1.msra.mxu0 0.0
  %996 = vmatprep.subr.mxu0 0.0
  %997 = vmatpush1.msra.mxu0 0.0
  %998 = vmatprep.subr.mxu0 0.0
  %999 = vmatpush1.msra.mxu0 0.0
  %1000 = vmatprep.subr.mxu0 0.0
  %1001 = vmatpush1.msra.mxu0 0.0
  %1002 = vmatprep.subr.mxu0 0.0
  %1003 = vmatpush1.msra.mxu0 0.0
  %1004 = vmatprep.mubr.f32.mxu0 %v935
  %1005 = vmatmul.mubr.f32.gmra.mrb[0].mxu0 %v821
  %v1006 = vpop.f32.mrb[0].mxu0
  %v1007 = vadd.f32 0.0, %v1006
  %v1008 = vpop.f32.mrb[0].mxu0
  %v1009 = vadd.f32 0.0, %v1008
  %1010 = vmatprep.mubr.f32.mxu0 %v938
  %1011 = vmatmul.mubr.f32.gmra.mrb[0].mxu0 %v823
  %v1012 = vpop.f32.mrb[0].mxu0
  %v1013 = vadd.f32 0.0, %v1012
  %v1014 = vpop.f32.mrb[0].mxu0
  %v1015 = vadd.f32 0.0, %v1014
  %1016 = vdwg.mxu0
  %1017 = vmatprep.subr.mxu0 %v828
  %1018 = vmatpush1.msra.mxu0 %v827
  %1019 = vmatprep.subr.mxu0 %v834
  %1020 = vmatpush1.msra.mxu0 %v833
  %1021 = vmatprep.subr.mxu0 %v840
  %1022 = vmatpush1.msra.mxu0 %v839
  %1023 = vmatprep.subr.mxu0 %v846
  %1024 = vmatpush1.msra.mxu0 %v845
  %1025 = vmatprep.subr.mxu0 %v852
  %1026 = vmatpush1.msra.mxu0 %v851
  %1027 = vmatprep.subr.mxu0 %v858
  %1028 = vmatpush1.msra.mxu0 %v857
  %1029 = vmatprep.subr.mxu0 %v864
  %1030 = vmatpush1.msra.mxu0 %v863
  %1031 = vmatprep.subr.mxu0 %v870
  %1032 = vmatpush1.msra.mxu0 %v869
  %1033 = vmatprep.subr.mxu0 %v876
  %1034 = vmatpush1.msra.mxu0 %v875
  %1035 = vmatprep.subr.mxu0 %v882
  %1036 = vmatpush1.msra.mxu0 %v881
  %1037 = vmatprep.subr.mxu0 %v888
  %1038 = vmatpush1.msra.mxu0 %v887
  %1039 = vmatprep.subr.mxu0 %v894
  %1040 = vmatpush1.msra.mxu0 %v893
  %1041 = vmatprep.subr.mxu0 %v900
  %1042 = vmatpush1.msra.mxu0 %v899
  %1043 = vmatprep.subr.mxu0 %v906
  %1044 = vmatpush1.msra.mxu0 %v905
  %1045 = vmatprep.subr.mxu0 %v912
  %1046 = vmatpush1.msra.mxu0 %v911
  %1047 = vmatprep.subr.mxu0 %v918
  %1048 = vmatpush1.msra.mxu0 %v917
  %1049 = vmatprep.subr.mxu0 %v924
  %1050 = vmatpush1.msra.mxu0 %v923
  %1051 = vmatprep.subr.mxu0 %v930
  %1052 = vmatpush1.msra.mxu0 %v929
  %1053 = vmatprep.subr.mxu0 0.0
  %1054 = vmatpush1.msra.mxu0 0.0
  %1055 = vmatprep.subr.mxu0 0.0
  %1056 = vmatpush1.msra.mxu0 0.0
  %1057 = vmatprep.subr.mxu0 0.0
  %1058 = vmatpush1.msra.mxu0 0.0
  %1059 = vmatprep.subr.mxu0 0.0
  %1060 = vmatpush1.msra.mxu0 0.0
  %1061 = vmatprep.subr.mxu0 0.0
  %1062 = vmatpush1.msra.mxu0 0.0
  %1063 = vmatprep.subr.mxu0 0.0
  %1064 = vmatpush1.msra.mxu0 0.0
  %1065 = vmatprep.subr.mxu0 0.0
  %1066 = vmatpush1.msra.mxu0 0.0
  %1067 = vmatprep.subr.mxu0 0.0
  %1068 = vmatpush1.msra.mxu0 0.0
  %1069 = vmatprep.subr.mxu0 0.0
  %1070 = vmatpush1.msra.mxu0 0.0
  %1071 = vmatprep.subr.mxu0 0.0
  %1072 = vmatpush1.msra.mxu0 0.0
  %1073 = vmatprep.subr.mxu0 0.0
  %1074 = vmatpush1.msra.mxu0 0.0
  %1075 = vmatprep.subr.mxu0 0.0
  %1076 = vmatpush1.msra.mxu0 0.0
  %1077 = vmatprep.subr.mxu0 0.0
  %1078 = vmatpush1.msra.mxu0 0.0
  %1079 = vmatprep.subr.mxu0 0.0
  %1080 = vmatpush1.msra.mxu0 0.0
  %1081 = vmatprep.mubr.f32.mxu0 %v935
  %1082 = vmatmul.mubr.f32.gmra.mrb[0].mxu0 %v821
  %v1083 = vpop.f32.mrb[0].mxu0
  %v1084 = vadd.f32 0.0, %v1083
  %v1085 = vpop.f32.mrb[0].mxu0
  %v1086 = vadd.f32 0.0, %v1085
  %1087 = vmatprep.mubr.f32.mxu0 %v938
  %1088 = vmatmul.mubr.f32.gmra.mrb[0].mxu0 %v823
  %v1089 = vpop.f32.mrb[0].mxu0
  %v1090 = vadd.f32 0.0, %v1089
  %v1091 = vpop.f32.mrb[0].mxu0
  %v1092 = vadd.f32 0.0, %v1091
  %1093 = vdwg.mxu0
  %1094 = vmatprep.subr.mxu0 %v830
  %1095 = vmatpush1.msra.mxu0 %v829
  %1096 = vmatprep.subr.mxu0 %v836
  %1097 = vmatpush1.msra.mxu0 %v835
  %1098 = vmatprep.subr.mxu0 %v842
  %1099 = vmatpush1.msra.mxu0 %v841
  %1100 = vmatprep.subr.mxu0 %v848
  %1101 = vmatpush1.msra.mxu0 %v847
  %1102 = vmatprep.subr.mxu0 %v854
  %1103 = vmatpush1.msra.mxu0 %v853
  %1104 = vmatprep.subr.mxu0 %v860
  %1105 = vmatpush1.msra.mxu0 %v859
  %1106 = vmatprep.subr.mxu0 %v866
  %1107 = vmatpush1.msra.mxu0 %v865
  %1108 = vmatprep.subr.mxu0 %v872
  %1109 = vmatpush1.msra.mxu0 %v871
  %1110 = vmatprep.subr.mxu0 %v878
  %1111 = vmatpush1.msra.mxu0 %v877
  %1112 = vmatprep.subr.mxu0 %v884
  %1113 = vmatpush1.msra.mxu0 %v883
  %1114 = vmatprep.subr.mxu0 %v890
  %1115 = vmatpush1.msra.mxu0 %v889
  %1116 = vmatprep.subr.mxu0 %v896
  %1117 = vmatpush1.msra.mxu0 %v895
  %1118 = vmatprep.subr.mxu0 %v902
  %1119 = vmatpush1.msra.mxu0 %v901
  %1120 = vmatprep.subr.mxu0 %v908
  %1121 = vmatpush1.msra.mxu0 %v907
  %1122 = vmatprep.subr.mxu0 %v914
  %1123 = vmatpush1.msra.mxu0 %v913
  %1124 = vmatprep.subr.mxu0 %v920
  %1125 = vmatpush1.msra.mxu0 %v919
  %1126 = vmatprep.subr.mxu0 %v926
  %1127 = vmatpush1.msra.mxu0 %v925
  %1128 = vmatprep.subr.mxu0 %v932
  %1129 = vmatpush1.msra.mxu0 %v931
  %1130 = vmatprep.subr.mxu0 0.0
  %1131 = vmatpush1.msra.mxu0 0.0
  %1132 = vmatprep.subr.mxu0 0.0
  %1133 = vmatpush1.msra.mxu0 0.0
  %1134 = vmatprep.subr.mxu0 0.0
  %1135 = vmatpush1.msra.mxu0 0.0
  %1136 = vmatprep.subr.mxu0 0.0
  %1137 = vmatpush1.msra.mxu0 0.0
  %1138 = vmatprep.subr.mxu0 0.0
  %1139 = vmatpush1.msra.mxu0 0.0
  %1140 = vmatprep.subr.mxu0 0.0
  %1141 = vmatpush1.msra.mxu0 0.0
  %1142 = vmatprep.subr.mxu0 0.0
  %1143 = vmatpush1.msra.mxu0 0.0
  %1144 = vmatprep.subr.mxu0 0.0
  %1145 = vmatpush1.msra.mxu0 0.0
  %1146 = vmatprep.subr.mxu0 0.0
  %1147 = vmatpush1.msra.mxu0 0.0
  %1148 = vmatprep.subr.mxu0 0.0
  %1149 = vmatpush1.msra.mxu0 0.0
  %1150 = vmatprep.subr.mxu0 0.0
  %1151 = vmatpush1.msra.mxu0 0.0
  %1152 = vmatprep.subr.mxu0 0.0
  %1153 = vmatpush1.msra.mxu0 0.0
  %1154 = vmatprep.subr.mxu0 0.0
  %1155 = vmatpush1.msra.mxu0 0.0
  %1156 = vmatprep.subr.mxu0 0.0
  %1157 = vmatpush1.msra.mxu0 0.0
  %1158 = vmatprep.mubr.f32.mxu0 %v935
  %1159 = vmatmul.mubr.f32.gmra.mrb[0].mxu0 %v821
  %v1160 = vpop.f32.mrb[0].mxu0
  %v1161 = vadd.f32 0.0, %v1160
  %v1162 = vpop.f32.mrb[0].mxu0
  %v1163 = vadd.f32 0.0, %v1162
  %1164 = vmatprep.mubr.f32.mxu0 %v938
  %1165 = vmatmul.mubr.f32.gmra.mrb[0].mxu0 %v823
  %v1166 = vpop.f32.mrb[0].mxu0
  %v1167 = vadd.f32 0.0, %v1166
  %v1168 = vpop.f32.mrb[0].mxu0
  %v1169 = vadd.f32 0.0, %v1168
  %1170 = vdwg.mxu0
  %v1172 = vlaneseq
  %v1173 = vshrl.u32 %v1172, 7
  %v1174 = vsub.s32 0, %v1173
  %v1175 = vrot.slane %v20, %v1174
  %v1176 = vlaneseq
  %v1177 = vshrl.u32 %v1176, 7
  %v1178 = vsub.s32 1, %v1177
  %v1179 = vrot.slane %v20, %v1178
  %v1180 = vlaneseq
  %v1181 = vshrl.u32 %v1180, 7
  %v1182 = vsub.s32 2, %v1181
  %v1183 = vrot.slane %v20, %v1182
  %v1184 = vlaneseq
  %v1185 = vshrl.u32 %v1184, 7
  %v1186 = vsub.s32 3, %v1185
  %v1187 = vrot.slane %v20, %v1186
  %v1188 = vlaneseq
  %v1189 = vshrl.u32 %v1188, 7
  %v1190 = vsub.s32 4, %v1189
  %v1191 = vrot.slane %v20, %v1190
  %v1192 = vlaneseq
  %v1193 = vshrl.u32 %v1192, 7
  %v1194 = vsub.s32 5, %v1193
  %v1195 = vrot.slane %v20, %v1194
  %v1202 = vmul.f32 %v1007, %v1175
  %v1203 = vmul.f32 %v1009, %v1179
  %v1204 = vmul.f32 %v1084, %v1183
  %v1205 = vmul.f32 %v1086, %v1187
  %v1206 = vmul.f32 %v1161, %v1191
  %v1207 = vmul.f32 %v1163, %v1195
  %v1208 = vmul.f32 %v1013, %v1175
  %v1209 = vmul.f32 %v1015, %v1179
  %v1210 = vmul.f32 %v1090, %v1183
  %v1211 = vmul.f32 %v1092, %v1187
  %v1212 = vmul.f32 %v1167, %v1191
  %v1213 = vmul.f32 %v1169, %v1195
  %v1214 = vadd.f32 %v1202, %v1203
  %v1215 = vadd.f32 %v1214, %v1204
  %v1216 = vadd.f32 %v1215, %v1205
  %v1217 = vadd.f32 %v1216, %v1206
  %v1218 = vadd.f32 %v1217, %v1207
  %1219 = vadd.xlane.f32.xlu0 %v1218
  %v1220 = vpop.xlane.xlu0 %1219
  %v1221 = vadd.f32 %v1208, %v1209
  %v1222 = vadd.f32 %v1221, %v1210
  %v1223 = vadd.f32 %v1222, %v1211
  %v1224 = vadd.f32 %v1223, %v1212
  %v1225 = vadd.f32 %v1224, %v1213
  %1226 = vadd.xlane.f32.xlu0 %v1225
  %v1227 = vpop.xlane.xlu0 %1226
  %v1228 = vmul.f32 %v1220, 0.001953125
  %v1229 = vmul.f32 %v1227, 0.001953125
  %v1230 = vmul.f32 %v1202, %v1007
  %v1231 = vmul.f32 %v1203, %v1009
  %v1232 = vmul.f32 %v1204, %v1084
  %v1233 = vmul.f32 %v1205, %v1086
  %v1234 = vmul.f32 %v1206, %v1161
  %v1235 = vmul.f32 %v1207, %v1163
  %v1236 = vmul.f32 %v1208, %v1013
  %v1237 = vmul.f32 %v1209, %v1015
  %v1238 = vmul.f32 %v1210, %v1090
  %v1239 = vmul.f32 %v1211, %v1092
  %v1240 = vmul.f32 %v1212, %v1167
  %v1241 = vmul.f32 %v1213, %v1169
  %v1242 = vadd.f32 %v1230, %v1231
  %v1243 = vadd.f32 %v1242, %v1232
  %v1244 = vadd.f32 %v1243, %v1233
  %v1245 = vadd.f32 %v1244, %v1234
  %v1246 = vadd.f32 %v1245, %v1235
  %1247 = vadd.xlane.f32.xlu0 %v1246
  %v1248 = vpop.xlane.xlu0 %1247
  %v1249 = vadd.f32 %v1236, %v1237
  %v1250 = vadd.f32 %v1249, %v1238
  %v1251 = vadd.f32 %v1250, %v1239
  %v1252 = vadd.f32 %v1251, %v1240
  %v1253 = vadd.f32 %v1252, %v1241
  %1254 = vadd.xlane.f32.xlu0 %v1253
  %v1255 = vpop.xlane.xlu0 %1254
  %v1256 = vmul.f32 %v1248, 0.001953125
  %v1257 = vmul.f32 %v1255, 0.001953125
  %v1258 = vmul.f32 %v1228, %v1228
  %v1259 = vmul.f32 %v1229, %v1229
  %v1260 = vsub.f32 %v1256, %v1258
  %v1261 = vsub.f32 %v1257, %v1259
  %v1262 = vadd.f32 %v1260, 1e-05
  %v1263 = vadd.f32 %v1261, 1e-05
  %v1264 = vrsqrt.pop %v1262
  %v1265 = vrsqrt.pop %v1263
  %v1266 = vld [vmem:[%s3] sm:$0xff]
  %v1267 = vld [vmem:[%s3 + $0x8] sm:$0xff]
  %v1268 = vmul.f32 %v1264, %v1266
  %v1269 = vmul.f32 %v1265, %v1267
  %v1270 = vld [vmem:[%s4] sm:$0xff]
  %v1271 = vld [vmem:[%s4 + $0x8] sm:$0xff]
  %v1272 = vmul.f32 %v1228, %v1268
  %v1273 = vmul.f32 %v1229, %v1269
  %v1274 = vsub.f32 %v1270, %v1272
  %v1275 = vsub.f32 %v1271, %v1273
  %1277 = vset.pattern.permute.xlu0 0
  %1278 = vperm.xlu0 %1277, %v1268
  %v1279 = vpop.permute.xlu0 %1278
  %1282 = vset.pattern.permute.xlu0 0
  %1283 = vperm.xlu0 %1282, %v1269
  %v1284 = vpop.permute.xlu0 %1283
  %v1286 = vmul.f32 %v1007, %v1279
  %v1287 = vmul.f32 %v1009, %v1279
  %v1288 = vmul.f32 %v1084, %v1279
  %v1289 = vmul.f32 %v1086, %v1279
  %v1290 = vmul.f32 %v1161, %v1279
  %v1291 = vmul.f32 %v1163, %v1279
  %v1292 = vmul.f32 %v1013, %v1284
  %v1293 = vmul.f32 %v1015, %v1284
  %v1294 = vmul.f32 %v1090, %v1284
  %v1295 = vmul.f32 %v1092, %v1284
  %v1296 = vmul.f32 %v1167, %v1284
  %v1297 = vmul.f32 %v1169, %v1284
  %1299 = vset.pattern.permute.xlu0 0
  %1300 = vperm.xlu0 %1299, %v1274
  %v1301 = vpop.permute.xlu0 %1300
  %1304 = vset.pattern.permute.xlu0 0
  %1305 = vperm.xlu0 %1304, %v1275
  %v1306 = vpop.permute.xlu0 %1305
  %v1308 = vadd.f32 %v1286, %v1301
  %v1309 = vadd.f32 %v1287, %v1301
  %v1310 = vadd.f32 %v1288, %v1301
  %v1311 = vadd.f32 %v1289, %v1301
  %v1312 = vadd.f32 %v1290, %v1301
  %v1313 = vadd.f32 %v1291, %v1301
  %v1314 = vadd.f32 %v1292, %v1306
  %v1315 = vadd.f32 %v1293, %v1306
  %v1316 = vadd.f32 %v1294, %v1306
  %v1317 = vadd.f32 %v1295, %v1306
  %v1318 = vadd.f32 %v1296, %v1306
  %v1319 = vadd.f32 %v1297, %v1306
  %v1320 = vmax.f32 %v1308, 0.0
  %v1321 = vmax.f32 %v1309, 0.0
  %v1322 = vmax.f32 %v1310, 0.0
  %v1323 = vmax.f32 %v1311, 0.0
  %v1324 = vmax.f32 %v1312, 0.0
  %v1325 = vmax.f32 %v1313, 0.0
  %v1326 = vmax.f32 %v1314, 0.0
  %v1327 = vmax.f32 %v1315, 0.0
  %v1328 = vmax.f32 %v1316, 0.0
  %v1329 = vmax.f32 %v1317, 0.0
  %v1330 = vmax.f32 %v1318, 0.0
  %v1331 = vmax.f32 %v1319, 0.0
  %v1332 = vmul.f32 %v1320, %v1175
  %v1333 = vmul.f32 %v1321, %v1179
  %v1334 = vmul.f32 %v1322, %v1183
  %v1335 = vmul.f32 %v1323, %v1187
  %v1336 = vmul.f32 %v1324, %v1191
  %v1337 = vmul.f32 %v1325, %v1195
  %v1338 = vmul.f32 %v1326, %v1175
  %v1339 = vmul.f32 %v1327, %v1179
  %v1340 = vmul.f32 %v1328, %v1183
  %v1341 = vmul.f32 %v1329, %v1187
  %v1342 = vmul.f32 %v1330, %v1191
  %v1343 = vmul.f32 %v1331, %v1195
  %1344 = vst [vmem:[#allocation2 + $0x8] sm:$0xff] %v1332
  %1345 = vst [vmem:[#allocation2 + $0x10] sm:$0xff] %v1333
  %1346 = vst [vmem:[#allocation2 + $0x18] sm:$0xff] %v1334
  %1347 = vst [vmem:[#allocation2 + $0x20] sm:$0xff] %v1335
  %1348 = vst [vmem:[#allocation2 + $0x28] sm:$0xff] %v1336
  %1349 = vst [vmem:[#allocation2 + $0x30] sm:$0xff] %v1337
  %1350 = vst [vmem:[#allocation2 + $0x48] sm:$0xff] %v1338
  %1351 = vst [vmem:[#allocation2 + $0x50] sm:$0xff] %v1339
  %1352 = vst [vmem:[#allocation2 + $0x58] sm:$0xff] %v1340
  %1353 = vst [vmem:[#allocation2 + $0x60] sm:$0xff] %v1341
  %1354 = vst [vmem:[#allocation2 + $0x68] sm:$0xff] %v1342
  %1355 = vst [vmem:[#allocation2 + $0x70] sm:$0xff] %v1343
  %v1356 = vld [vmem:[#allocation2] sm:$0xff]
  %v1357 = vld [vmem:[#allocation2 + $0x8] sm:$0xff]
  %v1358 = vld [vmem:[#allocation2 + $0x10] sm:$0xff]
  %v1359 = vld [vmem:[#allocation2 + $0x18] sm:$0xff]
  %v1360 = vld [vmem:[#allocation2 + $0x20] sm:$0xff]
  %v1361 = vld [vmem:[#allocation2 + $0x28] sm:$0xff]
  %v1362 = vld [vmem:[#allocation2 + $0x30] sm:$0xff]
  %v1363 = vld [vmem:[#allocation2 + $0x40] sm:$0xff]
  %v1364 = vld [vmem:[#allocation2 + $0x48] sm:$0xff]
  %v1365 = vld [vmem:[#allocation2 + $0x50] sm:$0xff]
  %v1366 = vld [vmem:[#allocation2 + $0x58] sm:$0xff]
  %v1367 = vld [vmem:[#allocation2 + $0x60] sm:$0xff]
  %v1368 = vld [vmem:[#allocation2 + $0x68] sm:$0xff]
  %v1369 = vld [vmem:[#allocation2 + $0x70] sm:$0xff]
  %1384 = vrot.lane.b32.xlu0 %v1356, 19
  %v1385 = vpop.permute.xlu0 %1384
  %1386 = vrot.lane.b32.xlu0 %v1357, 19
  %v1387 = vpop.permute.xlu0 %1386
  %1388 = vrot.lane.b32.xlu0 %v1358, 19
  %v1389 = vpop.permute.xlu0 %1388
  %1390 = vrot.lane.b32.xlu0 %v1359, 19
  %v1391 = vpop.permute.xlu0 %1390
  %1392 = vrot.lane.b32.xlu0 %v1360, 19
  %v1393 = vpop.permute.xlu0 %1392
  %1394 = vrot.lane.b32.xlu0 %v1361, 19
  %v1395 = vpop.permute.xlu0 %1394
  %1396 = vrot.lane.b32.xlu0 %v1362, 19
  %v1397 = vpop.permute.xlu0 %1396
  %1398 = vrot.lane.b32.xlu0 %v1363, 19
  %v1399 = vpop.permute.xlu0 %1398
  %1400 = vrot.lane.b32.xlu0 %v1364, 19
  %v1401 = vpop.permute.xlu0 %1400
  %1402 = vrot.lane.b32.xlu0 %v1365, 19
  %v1403 = vpop.permute.xlu0 %1402
  %1404 = vrot.lane.b32.xlu0 %v1366, 19
  %v1405 = vpop.permute.xlu0 %1404
  %1406 = vrot.lane.b32.xlu0 %v1367, 19
  %v1407 = vpop.permute.xlu0 %1406
  %1408 = vrot.lane.b32.xlu0 %v1368, 19
  %v1409 = vpop.permute.xlu0 %1408
  %1410 = vrot.lane.b32.xlu0 %v1369, 19
  %v1411 = vpop.permute.xlu0 %1410
  %v1412 = vsel %vm109, %v1385, %v1387
  %v1413 = vsel %vm109, %v1387, %v1389
  %v1414 = vsel %vm109, %v1389, %v1391
  %v1415 = vsel %vm109, %v1391, %v1393
  %v1416 = vsel %vm109, %v1393, %v1395
  %v1417 = vsel %vm109, %v1395, %v1397
  %v1418 = vsel %vm109, %v1399, %v1401
  %v1419 = vsel %vm109, %v1401, %v1403
  %v1420 = vsel %vm109, %v1403, %v1405
  %v1421 = vsel %vm109, %v1405, %v1407
  %v1422 = vsel %vm109, %v1407, %v1409
  %v1423 = vsel %vm109, %v1409, %v1411
  %1436 = vst [vmem:[#allocation3] sm:$0xff] %v1412
  %1437 = vst [vmem:[#allocation3 + $0x8] sm:$0xff] %v1413
  %1438 = vst [vmem:[#allocation3 + $0x10] sm:$0xff] %v1414
  %1439 = vst [vmem:[#allocation3 + $0x18] sm:$0xff] %v1415
  %1440 = vst [vmem:[#allocation3 + $0x20] sm:$0xff] %v1416
  %1441 = vst [vmem:[#allocation3 + $0x28] sm:$0xff] %v1417
  %1442 = vst [vmem:[#allocation3 + $0x30] sm:$0xff] %v1418
  %1443 = vst [vmem:[#allocation3 + $0x38] sm:$0xff] %v1419
  %1444 = vst [vmem:[#allocation3 + $0x40] sm:$0xff] %v1420
  %1445 = vst [vmem:[#allocation3 + $0x48] sm:$0xff] %v1421
  %1446 = vst [vmem:[#allocation3 + $0x50] sm:$0xff] %v1422
  %1447 = vst [vmem:[#allocation3 + $0x58] sm:$0xff] %v1423
  %v1448 = vld [vmem:[#allocation2] sm:$0xff]
  %v1449 = vld [vmem:[#allocation2 + $0x8] sm:$0xff]
  %v1450 = vld [vmem:[#allocation2 + $0x10] sm:$0xff]
  %v1451 = vld [vmem:[#allocation2 + $0x18] sm:$0xff]
  %v1452 = vld [vmem:[#allocation2 + $0x20] sm:$0xff]
  %v1453 = vld [vmem:[#allocation2 + $0x28] sm:$0xff]
  %v1454 = vld [vmem:[#allocation2 + $0x30] sm:$0xff]
  %v1455 = vld [vmem:[#allocation2 + $0x40] sm:$0xff]
  %v1456 = vld [vmem:[#allocation2 + $0x48] sm:$0xff]
  %v1457 = vld [vmem:[#allocation2 + $0x50] sm:$0xff]
  %v1458 = vld [vmem:[#allocation2 + $0x58] sm:$0xff]
  %v1459 = vld [vmem:[#allocation2 + $0x60] sm:$0xff]
  %v1460 = vld [vmem:[#allocation2 + $0x68] sm:$0xff]
  %v1461 = vld [vmem:[#allocation2 + $0x70] sm:$0xff]
  %1476 = vrot.lane.b32.xlu0 %v1448, 18
  %v1477 = vpop.permute.xlu0 %1476
  %1478 = vrot.lane.b32.xlu0 %v1449, 18
  %v1479 = vpop.permute.xlu0 %1478
  %1480 = vrot.lane.b32.xlu0 %v1450, 18
  %v1481 = vpop.permute.xlu0 %1480
  %1482 = vrot.lane.b32.xlu0 %v1451, 18
  %v1483 = vpop.permute.xlu0 %1482
  %1484 = vrot.lane.b32.xlu0 %v1452, 18
  %v1485 = vpop.permute.xlu0 %1484
  %1486 = vrot.lane.b32.xlu0 %v1453, 18
  %v1487 = vpop.permute.xlu0 %1486
  %1488 = vrot.lane.b32.xlu0 %v1454, 18
  %v1489 = vpop.permute.xlu0 %1488
  %1490 = vrot.lane.b32.xlu0 %v1455, 18
  %v1491 = vpop.permute.xlu0 %1490
  %1492 = vrot.lane.b32.xlu0 %v1456, 18
  %v1493 = vpop.permute.xlu0 %1492
  %1494 = vrot.lane.b32.xlu0 %v1457, 18
  %v1495 = vpop.permute.xlu0 %1494
  %1496 = vrot.lane.b32.xlu0 %v1458, 18
  %v1497 = vpop.permute.xlu0 %1496
  %1498 = vrot.lane.b32.xlu0 %v1459, 18
  %v1499 = vpop.permute.xlu0 %1498
  %1500 = vrot.lane.b32.xlu0 %v1460, 18
  %v1501 = vpop.permute.xlu0 %1500
  %1502 = vrot.lane.b32.xlu0 %v1461, 18
  %v1503 = vpop.permute.xlu0 %1502
  %v1504 = vsel %vm202, %v1477, %v1479
  %v1505 = vsel %vm202, %v1479, %v1481
  %v1506 = vsel %vm202, %v1481, %v1483
  %v1507 = vsel %vm202, %v1483, %v1485
  %v1508 = vsel %vm202, %v1485, %v1487
  %v1509 = vsel %vm202, %v1487, %v1489
  %v1510 = vsel %vm202, %v1491, %v1493
  %v1511 = vsel %vm202, %v1493, %v1495
  %v1512 = vsel %vm202, %v1495, %v1497
  %v1513 = vsel %vm202, %v1497, %v1499
  %v1514 = vsel %vm202, %v1499, %v1501
  %v1515 = vsel %vm202, %v1501, %v1503
  %1528 = vst [vmem:[#allocation3 + $0x60] sm:$0xff] %v1504
  %1529 = vst [vmem:[#allocation3 + $0x68] sm:$0xff] %v1505
  %1530 = vst [vmem:[#allocation3 + $0x70] sm:$0xff] %v1506
  %1531 = vst [vmem:[#allocation3 + $0x78] sm:$0xff] %v1507
  %1532 = vst [vmem:[#allocation3 + $0x80] sm:$0xff] %v1508
  %1533 = vst [vmem:[#allocation3 + $0x88] sm:$0xff] %v1509
  %1534 = vst [vmem:[#allocation3 + $0x90] sm:$0xff] %v1510
  %1535 = vst [vmem:[#allocation3 + $0x98] sm:$0xff] %v1511
  %1536 = vst [vmem:[#allocation3 + $0xa0] sm:$0xff] %v1512
  %1537 = vst [vmem:[#allocation3 + $0xa8] sm:$0xff] %v1513
  %1538 = vst [vmem:[#allocation3 + $0xb0] sm:$0xff] %v1514
  %1539 = vst [vmem:[#allocation3 + $0xb8] sm:$0xff] %v1515
  %v1540 = vld [vmem:[#allocation2] sm:$0xff]
  %v1541 = vld [vmem:[#allocation2 + $0x8] sm:$0xff]
  %v1542 = vld [vmem:[#allocation2 + $0x10] sm:$0xff]
  %v1543 = vld [vmem:[#allocation2 + $0x18] sm:$0xff]
  %v1544 = vld [vmem:[#allocation2 + $0x20] sm:$0xff]
  %v1545 = vld [vmem:[#allocation2 + $0x28] sm:$0xff]
  %v1546 = vld [vmem:[#allocation2 + $0x30] sm:$0xff]
  %v1547 = vld [vmem:[#allocation2 + $0x40] sm:$0xff]
  %v1548 = vld [vmem:[#allocation2 + $0x48] sm:$0xff]
  %v1549 = vld [vmem:[#allocation2 + $0x50] sm:$0xff]
  %v1550 = vld [vmem:[#allocation2 + $0x58] sm:$0xff]
  %v1551 = vld [vmem:[#allocation2 + $0x60] sm:$0xff]
  %v1552 = vld [vmem:[#allocation2 + $0x68] sm:$0xff]
  %v1553 = vld [vmem:[#allocation2 + $0x70] sm:$0xff]
  %1568 = vrot.lane.b32.xlu0 %v1540, 17
  %v1569 = vpop.permute.xlu0 %1568
  %1570 = vrot.lane.b32.xlu0 %v1541, 17
  %v1571 = vpop.permute.xlu0 %1570
  %1572 = vrot.lane.b32.xlu0 %v1542, 17
  %v1573 = vpop.permute.xlu0 %1572
  %1574 = vrot.lane.b32.xlu0 %v1543, 17
  %v1575 = vpop.permute.xlu0 %1574
  %1576 = vrot.lane.b32.xlu0 %v1544, 17
  %v1577 = vpop.permute.xlu0 %1576
  %1578 = vrot.lane.b32.xlu0 %v1545, 17
  %v1579 = vpop.permute.xlu0 %1578
  %1580 = vrot.lane.b32.xlu0 %v1546, 17
  %v1581 = vpop.permute.xlu0 %1580
  %1582 = vrot.lane.b32.xlu0 %v1547, 17
  %v1583 = vpop.permute.xlu0 %1582
  %1584 = vrot.lane.b32.xlu0 %v1548, 17
  %v1585 = vpop.permute.xlu0 %1584
  %1586 = vrot.lane.b32.xlu0 %v1549, 17
  %v1587 = vpop.permute.xlu0 %1586
  %1588 = vrot.lane.b32.xlu0 %v1550, 17
  %v1589 = vpop.permute.xlu0 %1588
  %1590 = vrot.lane.b32.xlu0 %v1551, 17
  %v1591 = vpop.permute.xlu0 %1590
  %1592 = vrot.lane.b32.xlu0 %v1552, 17
  %v1593 = vpop.permute.xlu0 %1592
  %1594 = vrot.lane.b32.xlu0 %v1553, 17
  %v1595 = vpop.permute.xlu0 %1594
  %v1596 = vsel %vm295, %v1569, %v1571
  %v1597 = vsel %vm295, %v1571, %v1573
  %v1598 = vsel %vm295, %v1573, %v1575
  %v1599 = vsel %vm295, %v1575, %v1577
  %v1600 = vsel %vm295, %v1577, %v1579
  %v1601 = vsel %vm295, %v1579, %v1581
  %v1602 = vsel %vm295, %v1583, %v1585
  %v1603 = vsel %vm295, %v1585, %v1587
  %v1604 = vsel %vm295, %v1587, %v1589
  %v1605 = vsel %vm295, %v1589, %v1591
  %v1606 = vsel %vm295, %v1591, %v1593
  %v1607 = vsel %vm295, %v1593, %v1595
  %1620 = vst [vmem:[#allocation3 + $0xc0] sm:$0xff] %v1596
  %1621 = vst [vmem:[#allocation3 + $0xc8] sm:$0xff] %v1597
  %1622 = vst [vmem:[#allocation3 + $0xd0] sm:$0xff] %v1598
  %1623 = vst [vmem:[#allocation3 + $0xd8] sm:$0xff] %v1599
  %1624 = vst [vmem:[#allocation3 + $0xe0] sm:$0xff] %v1600
  %1625 = vst [vmem:[#allocation3 + $0xe8] sm:$0xff] %v1601
  %1626 = vst [vmem:[#allocation3 + $0xf0] sm:$0xff] %v1602
  %1627 = vst [vmem:[#allocation3 + $0xf8] sm:$0xff] %v1603
  %1628 = vst [vmem:[#allocation3 + $0x100] sm:$0xff] %v1604
  %1629 = vst [vmem:[#allocation3 + $0x108] sm:$0xff] %v1605
  %1630 = vst [vmem:[#allocation3 + $0x110] sm:$0xff] %v1606
  %1631 = vst [vmem:[#allocation3 + $0x118] sm:$0xff] %v1607
  %v1632 = vld [vmem:[#allocation2] sm:$0xff]
  %v1633 = vld [vmem:[#allocation2 + $0x8] sm:$0xff]
  %v1634 = vld [vmem:[#allocation2 + $0x10] sm:$0xff]
  %v1635 = vld [vmem:[#allocation2 + $0x18] sm:$0xff]
  %v1636 = vld [vmem:[#allocation2 + $0x20] sm:$0xff]
  %v1637 = vld [vmem:[#allocation2 + $0x28] sm:$0xff]
  %v1638 = vld [vmem:[#allocation2 + $0x30] sm:$0xff]
  %v1639 = vld [vmem:[#allocation2 + $0x40] sm:$0xff]
  %v1640 = vld [vmem:[#allocation2 + $0x48] sm:$0xff]
  %v1641 = vld [vmem:[#allocation2 + $0x50] sm:$0xff]
  %v1642 = vld [vmem:[#allocation2 + $0x58] sm:$0xff]
  %v1643 = vld [vmem:[#allocation2 + $0x60] sm:$0xff]
  %v1644 = vld [vmem:[#allocation2 + $0x68] sm:$0xff]
  %v1645 = vld [vmem:[#allocation2 + $0x70] sm:$0xff]
  %1660 = vrot.lane.b32.xlu0 %v1632, 1
  %v1661 = vpop.permute.xlu0 %1660
  %1662 = vrot.lane.b32.xlu0 %v1633, 1
  %v1663 = vpop.permute.xlu0 %1662
  %1664 = vrot.lane.b32.xlu0 %v1634, 1
  %v1665 = vpop.permute.xlu0 %1664
  %1666 = vrot.lane.b32.xlu0 %v1635, 1
  %v1667 = vpop.permute.xlu0 %1666
  %1668 = vrot.lane.b32.xlu0 %v1636, 1
  %v1669 = vpop.permute.xlu0 %1668
  %1670 = vrot.lane.b32.xlu0 %v1637, 1
  %v1671 = vpop.permute.xlu0 %1670
  %1672 = vrot.lane.b32.xlu0 %v1638, 1
  %v1673 = vpop.permute.xlu0 %1672
  %1674 = vrot.lane.b32.xlu0 %v1639, 1
  %v1675 = vpop.permute.xlu0 %1674
  %1676 = vrot.lane.b32.xlu0 %v1640, 1
  %v1677 = vpop.permute.xlu0 %1676
  %1678 = vrot.lane.b32.xlu0 %v1641, 1
  %v1679 = vpop.permute.xlu0 %1678
  %1680 = vrot.lane.b32.xlu0 %v1642, 1
  %v1681 = vpop.permute.xlu0 %1680
  %1682 = vrot.lane.b32.xlu0 %v1643, 1
  %v1683 = vpop.permute.xlu0 %1682
  %1684 = vrot.lane.b32.xlu0 %v1644, 1
  %v1685 = vpop.permute.xlu0 %1684
  %1686 = vrot.lane.b32.xlu0 %v1645, 1
  %v1687 = vpop.permute.xlu0 %1686
  %v1688 = vsel %vm388, %v1661, %v1663
  %v1689 = vsel %vm388, %v1663, %v1665
  %v1690 = vsel %vm388, %v1665, %v1667
  %v1691 = vsel %vm388, %v1667, %v1669
  %v1692 = vsel %vm388, %v1669, %v1671
  %v1693 = vsel %vm388, %v1671, %v1673
  %v1694 = vsel %vm388, %v1675, %v1677
  %v1695 = vsel %vm388, %v1677, %v1679
  %v1696 = vsel %vm388, %v1679, %v1681
  %v1697 = vsel %vm388, %v1681, %v1683
  %v1698 = vsel %vm388, %v1683, %v1685
  %v1699 = vsel %vm388, %v1685, %v1687
  %1712 = vst [vmem:[#allocation3 + $0x120] sm:$0xff] %v1688
  %1713 = vst [vmem:[#allocation3 + $0x128] sm:$0xff] %v1689
  %1714 = vst [vmem:[#allocation3 + $0x130] sm:$0xff] %v1690
  %1715 = vst [vmem:[#allocation3 + $0x138] sm:$0xff] %v1691
  %1716 = vst [vmem:[#allocation3 + $0x140] sm:$0xff] %v1692
  %1717 = vst [vmem:[#allocation3 + $0x148] sm:$0xff] %v1693
  %1718 = vst [vmem:[#allocation3 + $0x150] sm:$0xff] %v1694
  %1719 = vst [vmem:[#allocation3 + $0x158] sm:$0xff] %v1695
  %1720 = vst [vmem:[#allocation3 + $0x160] sm:$0xff] %v1696
  %1721 = vst [vmem:[#allocation3 + $0x168] sm:$0xff] %v1697
  %1722 = vst [vmem:[#allocation3 + $0x170] sm:$0xff] %v1698
  %1723 = vst [vmem:[#allocation3 + $0x178] sm:$0xff] %v1699
  %v1724 = vld [vmem:[#allocation2 + $0x8] sm:$0xff]
  %v1725 = vld [vmem:[#allocation2 + $0x10] sm:$0xff]
  %v1726 = vld [vmem:[#allocation2 + $0x18] sm:$0xff]
  %v1727 = vld [vmem:[#allocation2 + $0x20] sm:$0xff]
  %v1728 = vld [vmem:[#allocation2 + $0x28] sm:$0xff]
  %v1729 = vld [vmem:[#allocation2 + $0x30] sm:$0xff]
  %v1730 = vld [vmem:[#allocation2 + $0x48] sm:$0xff]
  %v1731 = vld [vmem:[#allocation2 + $0x50] sm:$0xff]
  %v1732 = vld [vmem:[#allocation2 + $0x58] sm:$0xff]
  %v1733 = vld [vmem:[#allocation2 + $0x60] sm:$0xff]
  %v1734 = vld [vmem:[#allocation2 + $0x68] sm:$0xff]
  %v1735 = vld [vmem:[#allocation2 + $0x70] sm:$0xff]
  %1736 = vst [vmem:[#allocation3 + $0x180] sm:$0xff] %v1724
  %1737 = vst [vmem:[#allocation3 + $0x188] sm:$0xff] %v1725
  %1738 = vst [vmem:[#allocation3 + $0x190] sm:$0xff] %v1726
  %1739 = vst [vmem:[#allocation3 + $0x198] sm:$0xff] %v1727
  %1740 = vst [vmem:[#allocation3 + $0x1a0] sm:$0xff] %v1728
  %1741 = vst [vmem:[#allocation3 + $0x1a8] sm:$0xff] %v1729
  %1742 = vst [vmem:[#allocation3 + $0x1b0] sm:$0xff] %v1730
  %1743 = vst [vmem:[#allocation3 + $0x1b8] sm:$0xff] %v1731
  %1744 = vst [vmem:[#allocation3 + $0x1c0] sm:$0xff] %v1732
  %1745 = vst [vmem:[#allocation3 + $0x1c8] sm:$0xff] %v1733
  %1746 = vst [vmem:[#allocation3 + $0x1d0] sm:$0xff] %v1734
  %1747 = vst [vmem:[#allocation3 + $0x1d8] sm:$0xff] %v1735
  %v1748 = vld [vmem:[#allocation2 + $0x8] sm:$0xff]
  %v1749 = vld [vmem:[#allocation2 + $0x10] sm:$0xff]
  %v1750 = vld [vmem:[#allocation2 + $0x18] sm:$0xff]
  %v1751 = vld [vmem:[#allocation2 + $0x20] sm:$0xff]
  %v1752 = vld [vmem:[#allocation2 + $0x28] sm:$0xff]
  %v1753 = vld [vmem:[#allocation2 + $0x30] sm:$0xff]
  %v1754 = vld [vmem:[#allocation2 + $0x38] sm:$0xff]
  %v1755 = vld [vmem:[#allocation2 + $0x48] sm:$0xff]
  %v1756 = vld [vmem:[#allocation2 + $0x50] sm:$0xff]
  %v1757 = vld [vmem:[#allocation2 + $0x58] sm:$0xff]
  %v1758 = vld [vmem:[#allocation2 + $0x60] sm:$0xff]
  %v1759 = vld [vmem:[#allocation2 + $0x68] sm:$0xff]
  %v1760 = vld [vmem:[#allocation2 + $0x70] sm:$0xff]
  %v1761 = vld [vmem:[#allocation2 + $0x78] sm:$0xff]
  %1776 = vrot.lane.b32.xlu0 %v1748, 127
  %v1777 = vpop.permute.xlu0 %1776
  %1778 = vrot.lane.b32.xlu0 %v1749, 127
  %v1779 = vpop.permute.xlu0 %1778
  %1780 = vrot.lane.b32.xlu0 %v1750, 127
  %v1781 = vpop.permute.xlu0 %1780
  %1782 = vrot.lane.b32.xlu0 %v1751, 127
  %v1783 = vpop.permute.xlu0 %1782
  %1784 = vrot.lane.b32.xlu0 %v1752, 127
  %v1785 = vpop.permute.xlu0 %1784
  %1786 = vrot.lane.b32.xlu0 %v1753, 127
  %v1787 = vpop.permute.xlu0 %1786
  %1788 = vrot.lane.b32.xlu0 %v1754, 127
  %v1789 = vpop.permute.xlu0 %1788
  %1790 = vrot.lane.b32.xlu0 %v1755, 127
  %v1791 = vpop.permute.xlu0 %1790
  %1792 = vrot.lane.b32.xlu0 %v1756, 127
  %v1793 = vpop.permute.xlu0 %1792
  %1794 = vrot.lane.b32.xlu0 %v1757, 127
  %v1795 = vpop.permute.xlu0 %1794
  %1796 = vrot.lane.b32.xlu0 %v1758, 127
  %v1797 = vpop.permute.xlu0 %1796
  %1798 = vrot.lane.b32.xlu0 %v1759, 127
  %v1799 = vpop.permute.xlu0 %1798
  %1800 = vrot.lane.b32.xlu0 %v1760, 127
  %v1801 = vpop.permute.xlu0 %1800
  %1802 = vrot.lane.b32.xlu0 %v1761, 127
  %v1803 = vpop.permute.xlu0 %1802
  %v1804 = vsel %vm505, %v1777, %v1779
  %v1805 = vsel %vm505, %v1779, %v1781
  %v1806 = vsel %vm505, %v1781, %v1783
  %v1807 = vsel %vm505, %v1783, %v1785
  %v1808 = vsel %vm505, %v1785, %v1787
  %v1809 = vsel %vm505, %v1787, %v1789
  %v1810 = vsel %vm505, %v1791, %v1793
  %v1811 = vsel %vm505, %v1793, %v1795
  %v1812 = vsel %vm505, %v1795, %v1797
  %v1813 = vsel %vm505, %v1797, %v1799
  %v1814 = vsel %vm505, %v1799, %v1801
  %v1815 = vsel %vm505, %v1801, %v1803
  %1828 = vst [vmem:[#allocation3 + $0x1e0] sm:$0xff] %v1804
  %1829 = vst [vmem:[#allocation3 + $0x1e8] sm:$0xff] %v1805
  %1830 = vst [vmem:[#allocation3 + $0x1f0] sm:$0xff] %v1806
  %1831 = vst [vmem:[#allocation3 + $0x1f8] sm:$0xff] %v1807
  %1832 = vst [vmem:[#allocation3 + $0x200] sm:$0xff] %v1808
  %1833 = vst [vmem:[#allocation3 + $0x208] sm:$0xff] %v1809
  %1834 = vst [vmem:[#allocation3 + $0x210] sm:$0xff] %v1810
  %1835 = vst [vmem:[#allocation3 + $0x218] sm:$0xff] %v1811
  %1836 = vst [vmem:[#allocation3 + $0x220] sm:$0xff] %v1812
  %1837 = vst [vmem:[#allocation3 + $0x228] sm:$0xff] %v1813
  %1838 = vst [vmem:[#allocation3 + $0x230] sm:$0xff] %v1814
  %1839 = vst [vmem:[#allocation3 + $0x238] sm:$0xff] %v1815
  %v1840 = vld [vmem:[#allocation2 + $0x8] sm:$0xff]
  %v1841 = vld [vmem:[#allocation2 + $0x10] sm:$0xff]
  %v1842 = vld [vmem:[#allocation2 + $0x18] sm:$0xff]
  %v1843 = vld [vmem:[#allocation2 + $0x20] sm:$0xff]
  %v1844 = vld [vmem:[#allocation2 + $0x28] sm:$0xff]
  %v1845 = vld [vmem:[#allocation2 + $0x30] sm:$0xff]
  %v1846 = vld [vmem:[#allocation2 + $0x38] sm:$0xff]
  %v1847 = vld [vmem:[#allocation2 + $0x48] sm:$0xff]
  %v1848 = vld [vmem:[#allocation2 + $0x50] sm:$0xff]
  %v1849 = vld [vmem:[#allocation2 + $0x58] sm:$0xff]
  %v1850 = vld [vmem:[#allocation2 + $0x60] sm:$0xff]
  %v1851 = vld [vmem:[#allocation2 + $0x68] sm:$0xff]
  %v1852 = vld [vmem:[#allocation2 + $0x70] sm:$0xff]
  %v1853 = vld [vmem:[#allocation2 + $0x78] sm:$0xff]
  %1868 = vrot.lane.b32.xlu0 %v1840, 111
  %v1869 = vpop.permute.xlu0 %1868
  %1870 = vrot.lane.b32.xlu0 %v1841, 111
  %v1871 = vpop.permute.xlu0 %1870
  %1872 = vrot.lane.b32.xlu0 %v1842, 111
  %v1873 = vpop.permute.xlu0 %1872
  %1874 = vrot.lane.b32.xlu0 %v1843, 111
  %v1875 = vpop.permute.xlu0 %1874
  %1876 = vrot.lane.b32.xlu0 %v1844, 111
  %v1877 = vpop.permute.xlu0 %1876
  %1878 = vrot.lane.b32.xlu0 %v1845, 111
  %v1879 = vpop.permute.xlu0 %1878
  %1880 = vrot.lane.b32.xlu0 %v1846, 111
  %v1881 = vpop.permute.xlu0 %1880
  %1882 = vrot.lane.b32.xlu0 %v1847, 111
  %v1883 = vpop.permute.xlu0 %1882
  %1884 = vrot.lane.b32.xlu0 %v1848, 111
  %v1885 = vpop.permute.xlu0 %1884
  %1886 = vrot.lane.b32.xlu0 %v1849, 111
  %v1887 = vpop.permute.xlu0 %1886
  %1888 = vrot.lane.b32.xlu0 %v1850, 111
  %v1889 = vpop.permute.xlu0 %1888
  %1890 = vrot.lane.b32.xlu0 %v1851, 111
  %v1891 = vpop.permute.xlu0 %1890
  %1892 = vrot.lane.b32.xlu0 %v1852, 111
  %v1893 = vpop.permute.xlu0 %1892
  %1894 = vrot.lane.b32.xlu0 %v1853, 111
  %v1895 = vpop.permute.xlu0 %1894
  %v1896 = vsel %vm598, %v1869, %v1871
  %v1897 = vsel %vm598, %v1871, %v1873
  %v1898 = vsel %vm598, %v1873, %v1875
  %v1899 = vsel %vm598, %v1875, %v1877
  %v1900 = vsel %vm598, %v1877, %v1879
  %v1901 = vsel %vm598, %v1879, %v1881
  %v1902 = vsel %vm598, %v1883, %v1885
  %v1903 = vsel %vm598, %v1885, %v1887
  %v1904 = vsel %vm598, %v1887, %v1889
  %v1905 = vsel %vm598, %v1889, %v1891
  %v1906 = vsel %vm598, %v1891, %v1893
  %v1907 = vsel %vm598, %v1893, %v1895
  %1920 = vst [vmem:[#allocation3 + $0x240] sm:$0xff] %v1896
  %1921 = vst [vmem:[#allocation3 + $0x248] sm:$0xff] %v1897
  %1922 = vst [vmem:[#allocation3 + $0x250] sm:$0xff] %v1898
  %1923 = vst [vmem:[#allocation3 + $0x258] sm:$0xff] %v1899
  %1924 = vst [vmem:[#allocation3 + $0x260] sm:$0xff] %v1900
  %1925 = vst [vmem:[#allocation3 + $0x268] sm:$0xff] %v1901
  %1926 = vst [vmem:[#allocation3 + $0x270] sm:$0xff] %v1902
  %1927 = vst [vmem:[#allocation3 + $0x278] sm:$0xff] %v1903
  %1928 = vst [vmem:[#allocation3 + $0x280] sm:$0xff] %v1904
  %1929 = vst [vmem:[#allocation3 + $0x288] sm:$0xff] %v1905
  %1930 = vst [vmem:[#allocation3 + $0x290] sm:$0xff] %v1906
  %1931 = vst [vmem:[#allocation3 + $0x298] sm:$0xff] %v1907
  %v1932 = vld [vmem:[#allocation2 + $0x8] sm:$0xff]
  %v1933 = vld [vmem:[#allocation2 + $0x10] sm:$0xff]
  %v1934 = vld [vmem:[#allocation2 + $0x18] sm:$0xff]
  %v1935 = vld [vmem:[#allocation2 + $0x20] sm:$0xff]
  %v1936 = vld [vmem:[#allocation2 + $0x28] sm:$0xff]
  %v1937 = vld [vmem:[#allocation2 + $0x30] sm:$0xff]
  %v1938 = vld [vmem:[#allocation2 + $0x38] sm:$0xff]
  %v1939 = vld [vmem:[#allocation2 + $0x48] sm:$0xff]
  %v1940 = vld [vmem:[#allocation2 + $0x50] sm:$0xff]
  %v1941 = vld [vmem:[#allocation2 + $0x58] sm:$0xff]
  %v1942 = vld [vmem:[#allocation2 + $0x60] sm:$0xff]
  %v1943 = vld [vmem:[#allocation2 + $0x68] sm:$0xff]
  %v1944 = vld [vmem:[#allocation2 + $0x70] sm:$0xff]
  %v1945 = vld [vmem:[#allocation2 + $0x78] sm:$0xff]
  %1960 = vrot.lane.b32.xlu0 %v1932, 110
  %v1961 = vpop.permute.xlu0 %1960
  %1962 = vrot.lane.b32.xlu0 %v1933, 110
  %v1963 = vpop.permute.xlu0 %1962
  %1964 = vrot.lane.b32.xlu0 %v1934, 110
  %v1965 = vpop.permute.xlu0 %1964
  %1966 = vrot.lane.b32.xlu0 %v1935, 110
  %v1967 = vpop.permute.xlu0 %1966
  %1968 = vrot.lane.b32.xlu0 %v1936, 110
  %v1969 = vpop.permute.xlu0 %1968
  %1970 = vrot.lane.b32.xlu0 %v1937, 110
  %v1971 = vpop.permute.xlu0 %1970
  %1972 = vrot.lane.b32.xlu0 %v1938, 110
  %v1973 = vpop.permute.xlu0 %1972
  %1974 = vrot.lane.b32.xlu0 %v1939, 110
  %v1975 = vpop.permute.xlu0 %1974
  %1976 = vrot.lane.b32.xlu0 %v1940, 110
  %v1977 = vpop.permute.xlu0 %1976
  %1978 = vrot.lane.b32.xlu0 %v1941, 110
  %v1979 = vpop.permute.xlu0 %1978
  %1980 = vrot.lane.b32.xlu0 %v1942, 110
  %v1981 = vpop.permute.xlu0 %1980
  %1982 = vrot.lane.b32.xlu0 %v1943, 110
  %v1983 = vpop.permute.xlu0 %1982
  %1984 = vrot.lane.b32.xlu0 %v1944, 110
  %v1985 = vpop.permute.xlu0 %1984
  %1986 = vrot.lane.b32.xlu0 %v1945, 110
  %v1987 = vpop.permute.xlu0 %1986
  %v1988 = vsel %vm691, %v1961, %v1963
  %v1989 = vsel %vm691, %v1963, %v1965
  %v1990 = vsel %vm691, %v1965, %v1967
  %v1991 = vsel %vm691, %v1967, %v1969
  %v1992 = vsel %vm691, %v1969, %v1971
  %v1993 = vsel %vm691, %v1971, %v1973
  %v1994 = vsel %vm691, %v1975, %v1977
  %v1995 = vsel %vm691, %v1977, %v1979
  %v1996 = vsel %vm691, %v1979, %v1981
  %v1997 = vsel %vm691, %v1981, %v1983
  %v1998 = vsel %vm691, %v1983, %v1985
  %v1999 = vsel %vm691, %v1985, %v1987
  %2012 = vst [vmem:[#allocation3 + $0x2a0] sm:$0xff] %v1988
  %2013 = vst [vmem:[#allocation3 + $0x2a8] sm:$0xff] %v1989
  %2014 = vst [vmem:[#allocation3 + $0x2b0] sm:$0xff] %v1990
  %2015 = vst [vmem:[#allocation3 + $0x2b8] sm:$0xff] %v1991
  %2016 = vst [vmem:[#allocation3 + $0x2c0] sm:$0xff] %v1992
  %2017 = vst [vmem:[#allocation3 + $0x2c8] sm:$0xff] %v1993
  %2018 = vst [vmem:[#allocation3 + $0x2d0] sm:$0xff] %v1994
  %2019 = vst [vmem:[#allocation3 + $0x2d8] sm:$0xff] %v1995
  %2020 = vst [vmem:[#allocation3 + $0x2e0] sm:$0xff] %v1996
  %2021 = vst [vmem:[#allocation3 + $0x2e8] sm:$0xff] %v1997
  %2022 = vst [vmem:[#allocation3 + $0x2f0] sm:$0xff] %v1998
  %2023 = vst [vmem:[#allocation3 + $0x2f8] sm:$0xff] %v1999
  %v2024 = vld [vmem:[#allocation2 + $0x8] sm:$0xff]
  %v2025 = vld [vmem:[#allocation2 + $0x10] sm:$0xff]
  %v2026 = vld [vmem:[#allocation2 + $0x18] sm:$0xff]
  %v2027 = vld [vmem:[#allocation2 + $0x20] sm:$0xff]
  %v2028 = vld [vmem:[#allocation2 + $0x28] sm:$0xff]
  %v2029 = vld [vmem:[#allocation2 + $0x30] sm:$0xff]
  %v2030 = vld [vmem:[#allocation2 + $0x38] sm:$0xff]
  %v2031 = vld [vmem:[#allocation2 + $0x48] sm:$0xff]
  %v2032 = vld [vmem:[#allocation2 + $0x50] sm:$0xff]
  %v2033 = vld [vmem:[#allocation2 + $0x58] sm:$0xff]
  %v2034 = vld [vmem:[#allocation2 + $0x60] sm:$0xff]
  %v2035 = vld [vmem:[#allocation2 + $0x68] sm:$0xff]
  %v2036 = vld [vmem:[#allocation2 + $0x70] sm:$0xff]
  %v2037 = vld [vmem:[#allocation2 + $0x78] sm:$0xff]
  %2052 = vrot.lane.b32.xlu0 %v2024, 109
  %v2053 = vpop.permute.xlu0 %2052
  %2054 = vrot.lane.b32.xlu0 %v2025, 109
  %v2055 = vpop.permute.xlu0 %2054
  %2056 = vrot.lane.b32.xlu0 %v2026, 109
  %v2057 = vpop.permute.xlu0 %2056
  %2058 = vrot.lane.b32.xlu0 %v2027, 109
  %v2059 = vpop.permute.xlu0 %2058
  %2060 = vrot.lane.b32.xlu0 %v2028, 109
  %v2061 = vpop.permute.xlu0 %2060
  %2062 = vrot.lane.b32.xlu0 %v2029, 109
  %v2063 = vpop.permute.xlu0 %2062
  %2064 = vrot.lane.b32.xlu0 %v2030, 109
  %v2065 = vpop.permute.xlu0 %2064
  %2066 = vrot.lane.b32.xlu0 %v2031, 109
  %v2067 = vpop.permute.xlu0 %2066
  %2068 = vrot.lane.b32.xlu0 %v2032, 109
  %v2069 = vpop.permute.xlu0 %2068
  %2070 = vrot.lane.b32.xlu0 %v2033, 109
  %v2071 = vpop.permute.xlu0 %2070
  %2072 = vrot.lane.b32.xlu0 %v2034, 109
  %v2073 = vpop.permute.xlu0 %2072
  %2074 = vrot.lane.b32.xlu0 %v2035, 109
  %v2075 = vpop.permute.xlu0 %2074
  %2076 = vrot.lane.b32.xlu0 %v2036, 109
  %v2077 = vpop.permute.xlu0 %2076
  %2078 = vrot.lane.b32.xlu0 %v2037, 109
  %v2079 = vpop.permute.xlu0 %2078
  %v2080 = vsel %vm784, %v2053, %v2055
  %v2081 = vsel %vm784, %v2055, %v2057
  %v2082 = vsel %vm784, %v2057, %v2059
  %v2083 = vsel %vm784, %v2059, %v2061
  %v2084 = vsel %vm784, %v2061, %v2063
  %v2085 = vsel %vm784, %v2063, %v2065
  %v2086 = vsel %vm784, %v2067, %v2069
  %v2087 = vsel %vm784, %v2069, %v2071
  %v2088 = vsel %vm784, %v2071, %v2073
  %v2089 = vsel %vm784, %v2073, %v2075
  %v2090 = vsel %vm784, %v2075, %v2077
  %v2091 = vsel %vm784, %v2077, %v2079
  %2104 = vst [vmem:[#allocation3 + $0x300] sm:$0xff] %v2080
  %2105 = vst [vmem:[#allocation3 + $0x308] sm:$0xff] %v2081
  %2106 = vst [vmem:[#allocation3 + $0x310] sm:$0xff] %v2082
  %2107 = vst [vmem:[#allocation3 + $0x318] sm:$0xff] %v2083
  %2108 = vst [vmem:[#allocation3 + $0x320] sm:$0xff] %v2084
  %2109 = vst [vmem:[#allocation3 + $0x328] sm:$0xff] %v2085
  %2110 = vst [vmem:[#allocation3 + $0x330] sm:$0xff] %v2086
  %2111 = vst [vmem:[#allocation3 + $0x338] sm:$0xff] %v2087
  %2112 = vst [vmem:[#allocation3 + $0x340] sm:$0xff] %v2088
  %2113 = vst [vmem:[#allocation3 + $0x348] sm:$0xff] %v2089
  %2114 = vst [vmem:[#allocation3 + $0x350] sm:$0xff] %v2090
  %2115 = vst [vmem:[#allocation3 + $0x358] sm:$0xff] %v2091
  %s2116 = scalar_lea.vmem %s2, 32
  %v2117 = vld [vmem:[%s2116] sm:$0xff]
  %v2118 = vld [vmem:[%s2116 + $0x8] sm:$0xff]
  %v2119 = vld [vmem:[%s2116 + $0x10] sm:$0xff]
  %v2120 = vld [vmem:[%s2116 + $0x18] sm:$0xff]
  %v2121 = vld [vmem:[#allocation3] sm:$0xff]
  %v2122 = vld [vmem:[#allocation3 + $0x8] sm:$0xff]
  %v2123 = vld [vmem:[#allocation3 + $0x10] sm:$0xff]
  %v2124 = vld [vmem:[#allocation3 + $0x18] sm:$0xff]
  %v2125 = vld [vmem:[#allocation3 + $0x20] sm:$0xff]
  %v2126 = vld [vmem:[#allocation3 + $0x28] sm:$0xff]
  %v2127 = vld [vmem:[#allocation3 + $0x30] sm:$0xff]
  %v2128 = vld [vmem:[#allocation3 + $0x38] sm:$0xff]
  %v2129 = vld [vmem:[#allocation3 + $0x40] sm:$0xff]
  %v2130 = vld [vmem:[#allocation3 + $0x48] sm:$0xff]
  %v2131 = vld [vmem:[#allocation3 + $0x50] sm:$0xff]
  %v2132 = vld [vmem:[#allocation3 + $0x58] sm:$0xff]
  %v2133 = vld [vmem:[#allocation3 + $0x60] sm:$0xff]
  %v2134 = vld [vmem:[#allocation3 + $0x68] sm:$0xff]
  %v2135 = vld [vmem:[#allocation3 + $0x70] sm:$0xff]
  %v2136 = vld [vmem:[#allocation3 + $0x78] sm:$0xff]
  %v2137 = vld [vmem:[#allocation3 + $0x80] sm:$0xff]
  %v2138 = vld [vmem:[#allocation3 + $0x88] sm:$0xff]
  %v2139 = vld [vmem:[#allocation3 + $0x90] sm:$0xff]
  %v2140 = vld [vmem:[#allocation3 + $0x98] sm:$0xff]
  %v2141 = vld [vmem:[#allocation3 + $0xa0] sm:$0xff]
  %v2142 = vld [vmem:[#allocation3 + $0xa8] sm:$0xff]
  %v2143 = vld [vmem:[#allocation3 + $0xb0] sm:$0xff]
  %v2144 = vld [vmem:[#allocation3 + $0xb8] sm:$0xff]
  %v2145 = vld [vmem:[#allocation3 + $0xc0] sm:$0xff]
  %v2146 = vld [vmem:[#allocation3 + $0xc8] sm:$0xff]
  %v2147 = vld [vmem:[#allocation3 + $0xd0] sm:$0xff]
  %v2148 = vld [vmem:[#allocation3 + $0xd8] sm:$0xff]
  %v2149 = vld [vmem:[#allocation3 + $0xe0] sm:$0xff]
  %v2150 = vld [vmem:[#allocation3 + $0xe8] sm:$0xff]
  %v2151 = vld [vmem:[#allocation3 + $0xf0] sm:$0xff]
  %v2152 = vld [vmem:[#allocation3 + $0xf8] sm:$0xff]
  %v2153 = vld [vmem:[#allocation3 + $0x100] sm:$0xff]
  %v2154 = vld [vmem:[#allocation3 + $0x108] sm:$0xff]
  %v2155 = vld [vmem:[#allocation3 + $0x110] sm:$0xff]
  %v2156 = vld [vmem:[#allocation3 + $0x118] sm:$0xff]
  %v2157 = vld [vmem:[#allocation3 + $0x120] sm:$0xff]
  %v2158 = vld [vmem:[#allocation3 + $0x128] sm:$0xff]
  %v2159 = vld [vmem:[#allocation3 + $0x130] sm:$0xff]
  %v2160 = vld [vmem:[#allocation3 + $0x138] sm:$0xff]
  %v2161 = vld [vmem:[#allocation3 + $0x140] sm:$0xff]
  %v2162 = vld [vmem:[#allocation3 + $0x148] sm:$0xff]
  %v2163 = vld [vmem:[#allocation3 + $0x150] sm:$0xff]
  %v2164 = vld [vmem:[#allocation3 + $0x158] sm:$0xff]
  %v2165 = vld [vmem:[#allocation3 + $0x160] sm:$0xff]
  %v2166 = vld [vmem:[#allocation3 + $0x168] sm:$0xff]
  %v2167 = vld [vmem:[#allocation3 + $0x170] sm:$0xff]
  %v2168 = vld [vmem:[#allocation3 + $0x178] sm:$0xff]
  %v2169 = vld [vmem:[#allocation3 + $0x180] sm:$0xff]
  %v2170 = vld [vmem:[#allocation3 + $0x188] sm:$0xff]
  %v2171 = vld [vmem:[#allocation3 + $0x190] sm:$0xff]
  %v2172 = vld [vmem:[#allocation3 + $0x198] sm:$0xff]
  %v2173 = vld [vmem:[#allocation3 + $0x1a0] sm:$0xff]
  %v2174 = vld [vmem:[#allocation3 + $0x1a8] sm:$0xff]
  %v2175 = vld [vmem:[#allocation3 + $0x1b0] sm:$0xff]
  %v2176 = vld [vmem:[#allocation3 + $0x1b8] sm:$0xff]
  %v2177 = vld [vmem:[#allocation3 + $0x1c0] sm:$0xff]
  %v2178 = vld [vmem:[#allocation3 + $0x1c8] sm:$0xff]
  %v2179 = vld [vmem:[#allocation3 + $0x1d0] sm:$0xff]
  %v2180 = vld [vmem:[#allocation3 + $0x1d8] sm:$0xff]
  %v2181 = vld [vmem:[#allocation3 + $0x1e0] sm:$0xff]
  %v2182 = vld [vmem:[#allocation3 + $0x1e8] sm:$0xff]
  %v2183 = vld [vmem:[#allocation3 + $0x1f0] sm:$0xff]
  %v2184 = vld [vmem:[#allocation3 + $0x1f8] sm:$0xff]
  %v2185 = vld [vmem:[#allocation3 + $0x200] sm:$0xff]
  %v2186 = vld [vmem:[#allocation3 + $0x208] sm:$0xff]
  %v2187 = vld [vmem:[#allocation3 + $0x210] sm:$0xff]
  %v2188 = vld [vmem:[#allocation3 + $0x218] sm:$0xff]
  %v2189 = vld [vmem:[#allocation3 + $0x220] sm:$0xff]
  %v2190 = vld [vmem:[#allocation3 + $0x228] sm:$0xff]
  %v2191 = vld [vmem:[#allocation3 + $0x230] sm:$0xff]
  %v2192 = vld [vmem:[#allocation3 + $0x238] sm:$0xff]
  %v2193 = vld [vmem:[#allocation3 + $0x240] sm:$0xff]
  %v2194 = vld [vmem:[#allocation3 + $0x248] sm:$0xff]
  %v2195 = vld [vmem:[#allocation3 + $0x250] sm:$0xff]
  %v2196 = vld [vmem:[#allocation3 + $0x258] sm:$0xff]
  %v2197 = vld [vmem:[#allocation3 + $0x260] sm:$0xff]
  %v2198 = vld [vmem:[#allocation3 + $0x268] sm:$0xff]
  %v2199 = vld [vmem:[#allocation3 + $0x270] sm:$0xff]
  %v2200 = vld [vmem:[#allocation3 + $0x278] sm:$0xff]
  %v2201 = vld [vmem:[#allocation3 + $0x280] sm:$0xff]
  %v2202 = vld [vmem:[#allocation3 + $0x288] sm:$0xff]
  %v2203 = vld [vmem:[#allocation3 + $0x290] sm:$0xff]
  %v2204 = vld [vmem:[#allocation3 + $0x298] sm:$0xff]
  %v2205 = vld [vmem:[#allocation3 + $0x2a0] sm:$0xff]
  %v2206 = vld [vmem:[#allocation3 + $0x2a8] sm:$0xff]
  %v2207 = vld [vmem:[#allocation3 + $0x2b0] sm:$0xff]
  %v2208 = vld [vmem:[#allocation3 + $0x2b8] sm:$0xff]
  %v2209 = vld [vmem:[#allocation3 + $0x2c0] sm:$0xff]
  %v2210 = vld [vmem:[#allocation3 + $0x2c8] sm:$0xff]
  %v2211 = vld [vmem:[#allocation3 + $0x2d0] sm:$0xff]
  %v2212 = vld [vmem:[#allocation3 + $0x2d8] sm:$0xff]
  %v2213 = vld [vmem:[#allocation3 + $0x2e0] sm:$0xff]
  %v2214 = vld [vmem:[#allocation3 + $0x2e8] sm:$0xff]
  %v2215 = vld [vmem:[#allocation3 + $0x2f0] sm:$0xff]
  %v2216 = vld [vmem:[#allocation3 + $0x2f8] sm:$0xff]
  %v2217 = vld [vmem:[#allocation3 + $0x300] sm:$0xff]
  %v2218 = vld [vmem:[#allocation3 + $0x308] sm:$0xff]
  %v2219 = vld [vmem:[#allocation3 + $0x310] sm:$0xff]
  %v2220 = vld [vmem:[#allocation3 + $0x318] sm:$0xff]
  %v2221 = vld [vmem:[#allocation3 + $0x320] sm:$0xff]
  %v2222 = vld [vmem:[#allocation3 + $0x328] sm:$0xff]
  %v2223 = vld [vmem:[#allocation3 + $0x330] sm:$0xff]
  %v2224 = vld [vmem:[#allocation3 + $0x338] sm:$0xff]
  %v2225 = vld [vmem:[#allocation3 + $0x340] sm:$0xff]
  %v2226 = vld [vmem:[#allocation3 + $0x348] sm:$0xff]
  %v2227 = vld [vmem:[#allocation3 + $0x350] sm:$0xff]
  %v2228 = vld [vmem:[#allocation3 + $0x358] sm:$0xff]
  %v2230 = vsel %vm933, %v2118, 0
  %v2233 = vsel %vm933, %v2120, 0
  %2235 = vmatprep.subr.mxu0 %v2122
  %2236 = vmatpush1.msra.mxu0 %v2121
  %2237 = vmatprep.subr.mxu0 %v2128
  %2238 = vmatpush1.msra.mxu0 %v2127
  %2239 = vmatprep.subr.mxu0 %v2134
  %2240 = vmatpush1.msra.mxu0 %v2133
  %2241 = vmatprep.subr.mxu0 %v2140
  %2242 = vmatpush1.msra.mxu0 %v2139
  %2243 = vmatprep.subr.mxu0 %v2146
  %2244 = vmatpush1.msra.mxu0 %v2145
  %2245 = vmatprep.subr.mxu0 %v2152
  %2246 = vmatpush1.msra.mxu0 %v2151
  %2247 = vmatprep.subr.mxu0 %v2158
  %2248 = vmatpush1.msra.mxu0 %v2157
  %2249 = vmatprep.subr.mxu0 %v2164
  %2250 = vmatpush1.msra.mxu0 %v2163
  %2251 = vmatprep.subr.mxu0 %v2170
  %2252 = vmatpush1.msra.mxu0 %v2169
  %2253 = vmatprep.subr.mxu0 %v2176
  %2254 = vmatpush1.msra.mxu0 %v2175
  %2255 = vmatprep.subr.mxu0 %v2182
  %2256 = vmatpush1.msra.mxu0 %v2181
  %2257 = vmatprep.subr.mxu0 %v2188
  %2258 = vmatpush1.msra.mxu0 %v2187
  %2259 = vmatprep.subr.mxu0 %v2194
  %2260 = vmatpush1.msra.mxu0 %v2193
  %2261 = vmatprep.subr.mxu0 %v2200
  %2262 = vmatpush1.msra.mxu0 %v2199
  %2263 = vmatprep.subr.mxu0 %v2206
  %2264 = vmatpush1.msra.mxu0 %v2205
  %2265 = vmatprep.subr.mxu0 %v2212
  %2266 = vmatpush1.msra.mxu0 %v2211
  %2267 = vmatprep.subr.mxu0 %v2218
  %2268 = vmatpush1.msra.mxu0 %v2217
  %2269 = vmatprep.subr.mxu0 %v2224
  %2270 = vmatpush1.msra.mxu0 %v2223
  %2271 = vmatprep.subr.mxu0 0.0
  %2272 = vmatpush1.msra.mxu0 0.0
  %2273 = vmatprep.subr.mxu0 0.0
  %2274 = vmatpush1.msra.mxu0 0.0
  %2275 = vmatprep.subr.mxu0 0.0
  %2276 = vmatpush1.msra.mxu0 0.0
  %2277 = vmatprep.subr.mxu0 0.0
  %2278 = vmatpush1.msra.mxu0 0.0
  %2279 = vmatprep.subr.mxu0 0.0
  %2280 = vmatpush1.msra.mxu0 0.0
  %2281 = vmatprep.subr.mxu0 0.0
  %2282 = vmatpush1.msra.mxu0 0.0
  %2283 = vmatprep.subr.mxu0 0.0
  %2284 = vmatpush1.msra.mxu0 0.0
  %2285 = vmatprep.subr.mxu0 0.0
  %2286 = vmatpush1.msra.mxu0 0.0
  %2287 = vmatprep.subr.mxu0 0.0
  %2288 = vmatpush1.msra.mxu0 0.0
  %2289 = vmatprep.subr.mxu0 0.0
  %2290 = vmatpush1.msra.mxu0 0.0
  %2291 = vmatprep.subr.mxu0 0.0
  %2292 = vmatpush1.msra.mxu0 0.0
  %2293 = vmatprep.subr.mxu0 0.0
  %2294 = vmatpush1.msra.mxu0 0.0
  %2295 = vmatprep.subr.mxu0 0.0
  %2296 = vmatpush1.msra.mxu0 0.0
  %2297 = vmatprep.subr.mxu0 0.0
  %2298 = vmatpush1.msra.mxu0 0.0
  %2299 = vmatprep.mubr.f32.mxu0 %v2230
  %2300 = vmatmul.mubr.f32.gmra.mrb[0].mxu0 %v2117
  %v2301 = vpop.f32.mrb[0].mxu0
  %v2302 = vadd.f32 0.0, %v2301
  %v2303 = vpop.f32.mrb[0].mxu0
  %v2304 = vadd.f32 0.0, %v2303
  %2305 = vmatprep.mubr.f32.mxu0 %v2233
  %2306 = vmatmul.mubr.f32.gmra.mrb[0].mxu0 %v2119
  %v2307 = vpop.f32.mrb[0].mxu0
  %v2308 = vadd.f32 0.0, %v2307
  %v2309 = vpop.f32.mrb[0].mxu0
  %v2310 = vadd.f32 0.0, %v2309
  %2311 = vdwg.mxu0
  %2312 = vmatprep.subr.mxu0 %v2124
  %2313 = vmatpush1.msra.mxu0 %v2123
  %2314 = vmatprep.subr.mxu0 %v2130
  %2315 = vmatpush1.msra.mxu0 %v2129
  %2316 = vmatprep.subr.mxu0 %v2136
  %2317 = vmatpush1.msra.mxu0 %v2135
  %2318 = vmatprep.subr.mxu0 %v2142
  %2319 = vmatpush1.msra.mxu0 %v2141
  %2320 = vmatprep.subr.mxu0 %v2148
  %2321 = vmatpush1.msra.mxu0 %v2147
  %2322 = vmatprep.subr.mxu0 %v2154
  %2323 = vmatpush1.msra.mxu0 %v2153
  %2324 = vmatprep.subr.mxu0 %v2160
  %2325 = vmatpush1.msra.mxu0 %v2159
  %2326 = vmatprep.subr.mxu0 %v2166
  %2327 = vmatpush1.msra.mxu0 %v2165
  %2328 = vmatprep.subr.mxu0 %v2172
  %2329 = vmatpush1.msra.mxu0 %v2171
  %2330 = vmatprep.subr.mxu0 %v2178
  %2331 = vmatpush1.msra.mxu0 %v2177
  %2332 = vmatprep.subr.mxu0 %v2184
  %2333 = vmatpush1.msra.mxu0 %v2183
  %2334 = vmatprep.subr.mxu0 %v2190
  %2335 = vmatpush1.msra.mxu0 %v2189
  %2336 = vmatprep.subr.mxu0 %v2196
  %2337 = vmatpush1.msra.mxu0 %v2195
  %2338 = vmatprep.subr.mxu0 %v2202
  %2339 = vmatpush1.msra.mxu0 %v2201
  %2340 = vmatprep.subr.mxu0 %v2208
  %2341 = vmatpush1.msra.mxu0 %v2207
  %2342 = vmatprep.subr.mxu0 %v2214
  %2343 = vmatpush1.msra.mxu0 %v2213
  %2344 = vmatprep.subr.mxu0 %v2220
  %2345 = vmatpush1.msra.mxu0 %v2219
  %2346 = vmatprep.subr.mxu0 %v2226
  %2347 = vmatpush1.msra.mxu0 %v2225
  %2348 = vmatprep.subr.mxu0 0.0
  %2349 = vmatpush1.msra.mxu0 0.0
  %2350 = vmatprep.subr.mxu0 0.0
  %2351 = vmatpush1.msra.mxu0 0.0
  %2352 = vmatprep.subr.mxu0 0.0
  %2353 = vmatpush1.msra.mxu0 0.0
  %2354 = vmatprep.subr.mxu0 0.0
  %2355 = vmatpush1.msra.mxu0 0.0
  %2356 = vmatprep.subr.mxu0 0.0
  %2357 = vmatpush1.msra.mxu0 0.0
  %2358 = vmatprep.subr.mxu0 0.0
  %2359 = vmatpush1.msra.mxu0 0.0
  %2360 = vmatprep.subr.mxu0 0.0
  %2361 = vmatpush1.msra.mxu0 0.0
  %2362 = vmatprep.subr.mxu0 0.0
  %2363 = vmatpush1.msra.mxu0 0.0
  %2364 = vmatprep.subr.mxu0 0.0
  %2365 = vmatpush1.msra.mxu0 0.0
  %2366 = vmatprep.subr.mxu0 0.0
  %2367 = vmatpush1.msra.mxu0 0.0
  %2368 = vmatprep.subr.mxu0 0.0
  %2369 = vmatpush1.msra.mxu0 0.0
  %2370 = vmatprep.subr.mxu0 0.0
  %2371 = vmatpush1.msra.mxu0 0.0
  %2372 = vmatprep.subr.mxu0 0.0
  %2373 = vmatpush1.msra.mxu0 0.0
  %2374 = vmatprep.subr.mxu0 0.0
  %2375 = vmatpush1.msra.mxu0 0.0
  %2376 = vmatprep.mubr.f32.mxu0 %v2230
  %2377 = vmatmul.mubr.f32.gmra.mrb[0].mxu0 %v2117
  %v2378 = vpop.f32.mrb[0].mxu0
  %v2379 = vadd.f32 0.0, %v2378
  %v2380 = vpop.f32.mrb[0].mxu0
  %v2381 = vadd.f32 0.0, %v2380
  %2382 = vmatprep.mubr.f32.mxu0 %v2233
  %2383 = vmatmul.mubr.f32.gmra.mrb[0].mxu0 %v2119
  %v2384 = vpop.f32.mrb[0].mxu0
  %v2385 = vadd.f32 0.0, %v2384
  %v2386 = vpop.f32.mrb[0].mxu0
  %v2387 = vadd.f32 0.0, %v2386
  %2388 = vdwg.mxu0
  %2389 = vmatprep.subr.mxu0 %v2126
  %2390 = vmatpush1.msra.mxu0 %v2125
  %2391 = vmatprep.subr.mxu0 %v2132
  %2392 = vmatpush1.msra.mxu0 %v2131
  %2393 = vmatprep.subr.mxu0 %v2138
  %2394 = vmatpush1.msra.mxu0 %v2137
  %2395 = vmatprep.subr.mxu0 %v2144
  %2396 = vmatpush1.msra.mxu0 %v2143
  %2397 = vmatprep.subr.mxu0 %v2150
  %2398 = vmatpush1.msra.mxu0 %v2149
  %2399 = vmatprep.subr.mxu0 %v2156
  %2400 = vmatpush1.msra.mxu0 %v2155
  %2401 = vmatprep.subr.mxu0 %v2162
  %2402 = vmatpush1.msra.mxu0 %v2161
  %2403 = vmatprep.subr.mxu0 %v2168
  %2404 = vmatpush1.msra.mxu0 %v2167
  %2405 = vmatprep.subr.mxu0 %v2174
  %2406 = vmatpush1.msra.mxu0 %v2173
  %2407 = vmatprep.subr.mxu0 %v2180
  %2408 = vmatpush1.msra.mxu0 %v2179
  %2409 = vmatprep.subr.mxu0 %v2186
  %2410 = vmatpush1.msra.mxu0 %v2185
  %2411 = vmatprep.subr.mxu0 %v2192
  %2412 = vmatpush1.msra.mxu0 %v2191
  %2413 = vmatprep.subr.mxu0 %v2198
  %2414 = vmatpush1.msra.mxu0 %v2197
  %2415 = vmatprep.subr.mxu0 %v2204
  %2416 = vmatpush1.msra.mxu0 %v2203
  %2417 = vmatprep.subr.mxu0 %v2210
  %2418 = vmatpush1.msra.mxu0 %v2209
  %2419 = vmatprep.subr.mxu0 %v2216
  %2420 = vmatpush1.msra.mxu0 %v2215
  %2421 = vmatprep.subr.mxu0 %v2222
  %2422 = vmatpush1.msra.mxu0 %v2221
  %2423 = vmatprep.subr.mxu0 %v2228
  %2424 = vmatpush1.msra.mxu0 %v2227
  %2425 = vmatprep.subr.mxu0 0.0
  %2426 = vmatpush1.msra.mxu0 0.0
  %2427 = vmatprep.subr.mxu0 0.0
  %2428 = vmatpush1.msra.mxu0 0.0
  %2429 = vmatprep.subr.mxu0 0.0
  %2430 = vmatpush1.msra.mxu0 0.0
  %2431 = vmatprep.subr.mxu0 0.0
  %2432 = vmatpush1.msra.mxu0 0.0
  %2433 = vmatprep.subr.mxu0 0.0
  %2434 = vmatpush1.msra.mxu0 0.0
  %2435 = vmatprep.subr.mxu0 0.0
  %2436 = vmatpush1.msra.mxu0 0.0
  %2437 = vmatprep.subr.mxu0 0.0
  %2438 = vmatpush1.msra.mxu0 0.0
  %2439 = vmatprep.subr.mxu0 0.0
  %2440 = vmatpush1.msra.mxu0 0.0
  %2441 = vmatprep.subr.mxu0 0.0
  %2442 = vmatpush1.msra.mxu0 0.0
  %2443 = vmatprep.subr.mxu0 0.0
  %2444 = vmatpush1.msra.mxu0 0.0
  %2445 = vmatprep.subr.mxu0 0.0
  %2446 = vmatpush1.msra.mxu0 0.0
  %2447 = vmatprep.subr.mxu0 0.0
  %2448 = vmatpush1.msra.mxu0 0.0
  %2449 = vmatprep.subr.mxu0 0.0
  %2450 = vmatpush1.msra.mxu0 0.0
  %2451 = vmatprep.subr.mxu0 0.0
  %2452 = vmatpush1.msra.mxu0 0.0
  %2453 = vmatprep.mubr.f32.mxu0 %v2230
  %2454 = vmatmul.mubr.f32.gmra.mrb[0].mxu0 %v2117
  %v2455 = vpop.f32.mrb[0].mxu0
  %v2456 = vadd.f32 0.0, %v2455
  %v2457 = vpop.f32.mrb[0].mxu0
  %v2458 = vadd.f32 0.0, %v2457
  %2459 = vmatprep.mubr.f32.mxu0 %v2233
  %2460 = vmatmul.mubr.f32.gmra.mrb[0].mxu0 %v2119
  %v2461 = vpop.f32.mrb[0].mxu0
  %v2462 = vadd.f32 0.0, %v2461
  %v2463 = vpop.f32.mrb[0].mxu0
  %v2464 = vadd.f32 0.0, %v2463
  %2465 = vdwg.mxu0
  %v2466 = vmul.f32 %v2302, %v1175
  %v2467 = vmul.f32 %v2304, %v1179
  %v2468 = vmul.f32 %v2379, %v1183
  %v2469 = vmul.f32 %v2381, %v1187
  %v2470 = vmul.f32 %v2456, %v1191
  %v2471 = vmul.f32 %v2458, %v1195
  %v2472 = vmul.f32 %v2308, %v1175
  %v2473 = vmul.f32 %v2310, %v1179
  %v2474 = vmul.f32 %v2385, %v1183
  %v2475 = vmul.f32 %v2387, %v1187
  %v2476 = vmul.f32 %v2462, %v1191
  %v2477 = vmul.f32 %v2464, %v1195
  %v2478 = vadd.f32 %v2466, %v2467
  %v2479 = vadd.f32 %v2478, %v2468
  %v2480 = vadd.f32 %v2479, %v2469
  %v2481 = vadd.f32 %v2480, %v2470
  %v2482 = vadd.f32 %v2481, %v2471
  %2483 = vadd.xlane.f32.xlu0 %v2482
  %v2484 = vpop.xlane.xlu0 %2483
  %v2485 = vadd.f32 %v2472, %v2473
  %v2486 = vadd.f32 %v2485, %v2474
  %v2487 = vadd.f32 %v2486, %v2475
  %v2488 = vadd.f32 %v2487, %v2476
  %v2489 = vadd.f32 %v2488, %v2477
  %2490 = vadd.xlane.f32.xlu0 %v2489
  %v2491 = vpop.xlane.xlu0 %2490
  %v2492 = vmul.f32 %v2484, 0.001953125
  %v2493 = vmul.f32 %v2491, 0.001953125
  %v2494 = vmul.f32 %v2466, %v2302
  %v2495 = vmul.f32 %v2467, %v2304
  %v2496 = vmul.f32 %v2468, %v2379
  %v2497 = vmul.f32 %v2469, %v2381
  %v2498 = vmul.f32 %v2470, %v2456
  %v2499 = vmul.f32 %v2471, %v2458
  %v2500 = vmul.f32 %v2472, %v2308
  %v2501 = vmul.f32 %v2473, %v2310
  %v2502 = vmul.f32 %v2474, %v2385
  %v2503 = vmul.f32 %v2475, %v2387
  %v2504 = vmul.f32 %v2476, %v2462
  %v2505 = vmul.f32 %v2477, %v2464
  %v2506 = vadd.f32 %v2494, %v2495
  %v2507 = vadd.f32 %v2506, %v2496
  %v2508 = vadd.f32 %v2507, %v2497
  %v2509 = vadd.f32 %v2508, %v2498
  %v2510 = vadd.f32 %v2509, %v2499
  %2511 = vadd.xlane.f32.xlu0 %v2510
  %v2512 = vpop.xlane.xlu0 %2511
  %v2513 = vadd.f32 %v2500, %v2501
  %v2514 = vadd.f32 %v2513, %v2502
  %v2515 = vadd.f32 %v2514, %v2503
  %v2516 = vadd.f32 %v2515, %v2504
  %v2517 = vadd.f32 %v2516, %v2505
  %2518 = vadd.xlane.f32.xlu0 %v2517
  %v2519 = vpop.xlane.xlu0 %2518
  %v2520 = vmul.f32 %v2512, 0.001953125
  %v2521 = vmul.f32 %v2519, 0.001953125
  %v2522 = vmul.f32 %v2492, %v2492
  %v2523 = vmul.f32 %v2493, %v2493
  %v2524 = vsub.f32 %v2520, %v2522
  %v2525 = vsub.f32 %v2521, %v2523
  %v2526 = vadd.f32 %v2524, 1e-05
  %v2527 = vadd.f32 %v2525, 1e-05
  %v2528 = vrsqrt.pop %v2526
  %v2529 = vrsqrt.pop %v2527
  %s2530 = scalar_lea.vmem %s3, 16
  %v2531 = vld [vmem:[%s2530] sm:$0xff]
  %v2532 = vld [vmem:[%s2530 + $0x8] sm:$0xff]
  %v2533 = vmul.f32 %v2528, %v2531
  %v2534 = vmul.f32 %v2529, %v2532
  %s2535 = scalar_lea.vmem %s4, 16
  %v2536 = vld [vmem:[%s2535] sm:$0xff]
  %v2537 = vld [vmem:[%s2535 + $0x8] sm:$0xff]
  %v2538 = vmul.f32 %v2492, %v2533
  %v2539 = vmul.f32 %v2493, %v2534
  %v2540 = vsub.f32 %v2536, %v2538
  %v2541 = vsub.f32 %v2537, %v2539
  %2543 = vset.pattern.permute.xlu0 0
  %2544 = vperm.xlu0 %2543, %v2533
  %v2545 = vpop.permute.xlu0 %2544
  %2548 = vset.pattern.permute.xlu0 0
  %2549 = vperm.xlu0 %2548, %v2534
  %v2550 = vpop.permute.xlu0 %2549
  %v2552 = vmul.f32 %v2302, %v2545
  %v2553 = vmul.f32 %v2304, %v2545
  %v2554 = vmul.f32 %v2379, %v2545
  %v2555 = vmul.f32 %v2381, %v2545
  %v2556 = vmul.f32 %v2456, %v2545
  %v2557 = vmul.f32 %v2458, %v2545
  %v2558 = vmul.f32 %v2308, %v2550
  %v2559 = vmul.f32 %v2310, %v2550
  %v2560 = vmul.f32 %v2385, %v2550
  %v2561 = vmul.f32 %v2387, %v2550
  %v2562 = vmul.f32 %v2462, %v2550
  %v2563 = vmul.f32 %v2464, %v2550
  %2565 = vset.pattern.permute.xlu0 0
  %2566 = vperm.xlu0 %2565, %v2540
  %v2567 = vpop.permute.xlu0 %2566
  %2570 = vset.pattern.permute.xlu0 0
  %2571 = vperm.xlu0 %2570, %v2541
  %v2572 = vpop.permute.xlu0 %2571
  %v2574 = vadd.f32 %v2552, %v2567
  %v2575 = vadd.f32 %v2553, %v2567
  %v2576 = vadd.f32 %v2554, %v2567
  %v2577 = vadd.f32 %v2555, %v2567
  %v2578 = vadd.f32 %v2556, %v2567
  %v2579 = vadd.f32 %v2557, %v2567
  %v2580 = vadd.f32 %v2558, %v2572
  %v2581 = vadd.f32 %v2559, %v2572
  %v2582 = vadd.f32 %v2560, %v2572
  %v2583 = vadd.f32 %v2561, %v2572
  %v2584 = vadd.f32 %v2562, %v2572
  %v2585 = vadd.f32 %v2563, %v2572
  %v2586 = vmax.f32 %v2574, 0.0
  %v2587 = vmax.f32 %v2575, 0.0
  %v2588 = vmax.f32 %v2576, 0.0
  %v2589 = vmax.f32 %v2577, 0.0
  %v2590 = vmax.f32 %v2578, 0.0
  %v2591 = vmax.f32 %v2579, 0.0
  %v2592 = vmax.f32 %v2580, 0.0
  %v2593 = vmax.f32 %v2581, 0.0
  %v2594 = vmax.f32 %v2582, 0.0
  %v2595 = vmax.f32 %v2583, 0.0
  %v2596 = vmax.f32 %v2584, 0.0
  %v2597 = vmax.f32 %v2585, 0.0
  %v2598 = vmul.f32 %v2586, %v1175
  %v2599 = vmul.f32 %v2587, %v1179
  %v2600 = vmul.f32 %v2588, %v1183
  %v2601 = vmul.f32 %v2589, %v1187
  %v2602 = vmul.f32 %v2590, %v1191
  %v2603 = vmul.f32 %v2591, %v1195
  %v2604 = vmul.f32 %v2592, %v1175
  %v2605 = vmul.f32 %v2593, %v1179
  %v2606 = vmul.f32 %v2594, %v1183
  %v2607 = vmul.f32 %v2595, %v1187
  %v2608 = vmul.f32 %v2596, %v1191
  %v2609 = vmul.f32 %v2597, %v1195
  %2610 = vst [vmem:[%s5] sm:$0xff] %v2598
  %2611 = vst [vmem:[%s5 + $0x8] sm:$0xff] %v2599
  %2612 = vst [vmem:[%s5 + $0x10] sm:$0xff] %v2600
  %2613 = vst [vmem:[%s5 + $0x18] sm:$0xff] %v2601
  %2614 = vst [vmem:[%s5 + $0x20] sm:$0xff] %v2602
  %2615 = vst [vmem:[%s5 + $0x28] sm:$0xff] %v2603
  %2616 = vst [vmem:[%s5 + $0x30] sm:$0xff] %v2604
  %2617 = vst [vmem:[%s5 + $0x38] sm:$0xff] %v2605
  %2618 = vst [vmem:[%s5 + $0x40] sm:$0xff] %v2606
  %2619 = vst [vmem:[%s5 + $0x48] sm:$0xff] %v2607
  %2620 = vst [vmem:[%s5 + $0x50] sm:$0xff] %v2608
  %2621 = vst [vmem:[%s5 + $0x58] sm:$0xff] %v2609
  // Predicated region
  $region22: #{block_series_forward.1} parent=0 // pred_check
    _
  $region23: #{block_series_forward.1} parent=0 // pred_check_branch
    %2623 = sbr.rel (0) target = $region25
  $region24: #{block_series_forward.1} parent=0 // pred_region
    _
  $region25: #{block_series_forward.1} parent=0 // pred_fallthru
    _
  // Predicated region
  $region26: #{block_series_forward.1} parent=0 // pred_check
    _
  $region27: #{block_series_forward.1} parent=0 // pred_check_branch
    %2625 = sbr.rel (0) target = $region29
  $region28: #{block_series_forward.1} parent=0 // pred_region
    _
  $region29: #{block_series_forward.1} parent=0 // pred_fallthru
    _

</llo_original>
